<compile_context>
chip_gen: v7x
topology: tpu7x:2x2x1
jax: 0.10.0
libtpu: 0.0.40
codegen_flags: <defaults>
</compile_context>

<pallas_src>
import jax
import jax.numpy as jnp
from jax.experimental import pallas as pl
from jax.experimental.pallas import tpu as pltpu

INPUT_SIZE = 256
HIDDEN_SIZE = 512


def _make_kernel(approx_sigmoid):
    def _autoencoder_kernel(x_ref,
                            w1_ref, b1_ref,
                            w2_ref, b2_ref,
                            w3_ref, b3_ref,
                            w4_ref, b4_ref,
                            o_ref):
        compute_dtype = w1_ref.dtype  # bf16 weights -> bf16 MXU inputs, f32 accum
        x = x_ref[...]
        if x.dtype != compute_dtype:
            x = x.astype(compute_dtype)

        # encoder: Linear + ReLU, Linear + ReLU
        h = jnp.dot(x, w1_ref[...], preferred_element_type=jnp.float32) + b1_ref[...]
        h = jnp.maximum(h, 0.0).astype(compute_dtype)

        h = jnp.dot(h, w2_ref[...], preferred_element_type=jnp.float32) + b2_ref[...]
        h = jnp.maximum(h, 0.0).astype(compute_dtype)

        # decoder: Linear + ReLU, Linear + Sigmoid
        h = jnp.dot(h, w3_ref[...], preferred_element_type=jnp.float32) + b3_ref[...]
        h = jnp.maximum(h, 0.0).astype(compute_dtype)

        logits = jnp.dot(h, w4_ref[...], preferred_element_type=jnp.float32) + b4_ref[...]

        if approx_sigmoid:
            # exp on the EUP, approx reciprocal also on the EUP (VALU stays idle)
            out = pl.reciprocal(1.0 + jnp.exp(-logits), approx=True)
        else:
            out = jax.nn.sigmoid(logits)
        o_ref[...] = out.astype(o_ref.dtype)

    return _autoencoder_kernel


def _round_up(x, m):
    return ((x + m - 1) // m) * m


def _pick_tile(batch, tile_b):
    # Round small batches to a multiple of 16 sublanes (bf16 packs 16 rows/vreg).
    tile = min(tile_b, _round_up(batch, 16))
    # Ensure >= 2 grid steps whenever the batch is splittable so both v7x
    # TensorCores get a tile; costs only ~0.35 us on single-TC chips.
    if batch > 16 and pl.cdiv(batch, tile) < 2:
        tile = _round_up(pl.cdiv(batch, 2), 16)
    return tile


def autoencoder_forward(x, params, *, tile_b=512, out_dtype=None,
                        approx_sigmoid=True,
                        vmem_limit_bytes=32 * 1024 * 1024):
    """x: [B, INPUT_SIZE] (f32 or bf16). params: transposed bf16 weights / f32 biases."""
    B, F = x.shape
    assert F == INPUT_SIZE
    if out_dtype is None:
        out_dtype = x.dtype

    tile = _pick_tile(B, tile_b)

    # Only tiny batches (B < tile, i.e. B < 16) pad up to one full tile; for all
    # other non-divisible batches the partial last block is masked by Pallas
    # (independent rows, dropped writes) -> no extra HBM copy of x.
    if B < tile:
        x = jnp.pad(x, ((0, tile - B), (0, 0)))
    b_arr = x.shape[0]
    grid = (pl.cdiv(b_arr, tile),)

    w1, b1 = params["w1"], params["b1"]   # [256,512] bf16, [1,512] f32
    w2, b2 = params["w2"], params["b2"]   # [512,512] bf16, [1,512] f32
    w3, b3 = params["w3"], params["b3"]   # [512,512] bf16, [1,512] f32
    w4, b4 = params["w4"], params["b4"]   # [512,256] bf16, [1,256] f32

    # Weights/biases: fully resident in VMEM, one DMA, no pipeline double-buffer.
    resident = pl.BlockSpec(memory_space=pltpu.MemorySpace.VMEM)

    weight_bytes = sum(int(a.size) * a.dtype.itemsize
                       for a in (w1, b1, w2, b2, w3, b3, w4, b4))
    flops = 2 * B * (2 * INPUT_SIZE * HIDDEN_SIZE + 2 * HIDDEN_SIZE * HIDDEN_SIZE)
    cost = pl.CostEstimate(
        flops=flops,
        transcendentals=2 * B * INPUT_SIZE,  # exp + approx reciprocal per output elem
        bytes_accessed=(weight_bytes
                        + B * INPUT_SIZE * x.dtype.itemsize
                        + B * INPUT_SIZE * jnp.dtype(out_dtype).itemsize),
    )

    out = pl.pallas_call(
        _make_kernel(approx_sigmoid),
        out_shape=jax.ShapeDtypeStruct((b_arr, INPUT_SIZE), out_dtype),
        grid_spec=pltpu.PrefetchScalarGridSpec(
            num_scalar_prefetch=0,
            grid=grid,
            in_specs=[
                pl.BlockSpec((tile, INPUT_SIZE), lambda i: (i, 0)),  # x tile
                resident, resident,   # w1, b1
                resident, resident,   # w2, b2
                resident, resident,   # w3, b3
                resident, resident,   # w4, b4
            ],
            out_specs=pl.BlockSpec((tile, INPUT_SIZE), lambda i: (i, 0)),
        ),
        compiler_params=pltpu.CompilerParams(
            dimension_semantics=("parallel",),
            vmem_limit_bytes=vmem_limit_bytes,
        ),
        cost_estimate=cost,
    )(x, w1, b1, w2, b2, w3, b3, w4, b4)

    return out[:B] if b_arr != B else out


def init_params(key, *, weight_dtype=jnp.bfloat16):
    """Weights stored [in, out] (transposed vs torch), bf16; biases [1, out] f32."""
    ks = jax.random.split(key, 8)

    def linear(kw, kb, fan_in, fan_out):
        bound = 1.0 / jnp.sqrt(fan_in)   # torch default uniform init
        w = jax.random.uniform(kw, (fan_in, fan_out), jnp.float32, -bound, bound)
        b = jax.random.uniform(kb, (1, fan_out), jnp.float32, -bound, bound)
        return w.astype(weight_dtype), b

    w1, b1 = linear(ks[0], ks[1], INPUT_SIZE, HIDDEN_SIZE)
    w2, b2 = linear(ks[2], ks[3], HIDDEN_SIZE, HIDDEN_SIZE)
    w3, b3 = linear(ks[4], ks[5], HIDDEN_SIZE, HIDDEN_SIZE)
    w4, b4 = linear(ks[6], ks[7], HIDDEN_SIZE, INPUT_SIZE)
    return dict(w1=w1, b1=b1, w2=w2, b2=b2, w3=w3, b3=b3, w4=w4, b4=b4)


def _reference(x, p):
    # f32 reference using the (bf16-rounded) weights upcast to f32.
    def fp(a):
        return a.astype(jnp.float32)
    h = jnp.maximum(x @ fp(p["w1"]) + p["b1"], 0.0)
    h = jnp.maximum(h @ fp(p["w2"]) + p["b2"], 0.0)
    h = jnp.maximum(h @ fp(p["w3"]) + p["b3"], 0.0)
    return jax.nn.sigmoid(h @ fp(p["w4"]) + p["b4"])


if __name__ == "__main__":
    key = jax.random.PRNGKey(0)
    k_x, k_x2, k_p = jax.random.split(key, 3)

    params = init_params(k_p)

    # Small demo batch (tile rounds up to 16, padded, grid=1).
    B = 8
    x = jax.random.uniform(k_x, (B, INPUT_SIZE), jnp.float32)
    out = jax.block_until_ready(autoencoder_forward(x, params))
    ref = _reference(x, params)
    assert out.shape == (B, INPUT_SIZE)
    # bf16 compute + approx reciprocal -> loosened tolerance vs f32 reference.
    assert jnp.allclose(out, ref, atol=2e-2, rtol=2e-2), "mismatch vs reference (small batch)"

    # Non-divisible batch exercises the 2-step grid with a masked partial last
    # block (tile=160, grid=2) -- no wrapper-side pad copy.
    B2 = 300
    x2 = jax.random.uniform(k_x2, (B2, INPUT_SIZE), jnp.float32)
    out2 = jax.block_until_ready(autoencoder_forward(x2, params))
    ref2 = _reference(x2, params)
    assert out2.shape == (B2, INPUT_SIZE)
    assert jnp.allclose(out2, ref2, atol=2e-2, rtol=2e-2), "mismatch vs reference (masked tile)"

    print("KERNEL_OK")
</pallas_src>

<mosaic_0001>
module attributes {stable_mosaic.version = 11 : i64} {
  func.func @_autoencoder_kernel(%arg0: i32, %arg1: memref<16x256xf32, #tpu.memory_space<vmem>>, %arg2: memref<256x512xbf16, #tpu.memory_space<vmem>>, %arg3: memref<1x512xf32, #tpu.memory_space<vmem>>, %arg4: memref<512x512xbf16, #tpu.memory_space<vmem>>, %arg5: memref<1x512xf32, #tpu.memory_space<vmem>>, %arg6: memref<512x512xbf16, #tpu.memory_space<vmem>>, %arg7: memref<1x512xf32, #tpu.memory_space<vmem>>, %arg8: memref<512x256xbf16, #tpu.memory_space<vmem>>, %arg9: memref<1x256xf32, #tpu.memory_space<vmem>>, %arg10: memref<16x256xf32, #tpu.memory_space<vmem>>) attributes {dimension_semantics = [#tpu.dimension_semantics<parallel>], iteration_bounds = array<i64: 1>, scalar_prefetch = 0 : i64, scratch_operands = 0 : i64, tpu.core_type = #tpu.core_type<tc>, window_params = [{transform_indices = @transform_0, window_bounds = array<i64: 16, 256>}, {pipeline_mode = #tpu.pipeline_mode<synchronous>, transform_indices = @transform_1, window_bounds = array<i64: 256, 512>}, {pipeline_mode = #tpu.pipeline_mode<synchronous>, transform_indices = @transform_2, window_bounds = array<i64: 1, 512>}, {pipeline_mode = #tpu.pipeline_mode<synchronous>, transform_indices = @transform_3, window_bounds = array<i64: 512, 512>}, {pipeline_mode = #tpu.pipeline_mode<synchronous>, transform_indices = @transform_4, window_bounds = array<i64: 1, 512>}, {pipeline_mode = #tpu.pipeline_mode<synchronous>, transform_indices = @transform_5, window_bounds = array<i64: 512, 512>}, {pipeline_mode = #tpu.pipeline_mode<synchronous>, transform_indices = @transform_6, window_bounds = array<i64: 1, 512>}, {pipeline_mode = #tpu.pipeline_mode<synchronous>, transform_indices = @transform_7, window_bounds = array<i64: 512, 256>}, {pipeline_mode = #tpu.pipeline_mode<synchronous>, transform_indices = @transform_8, window_bounds = array<i64: 1, 256>}, {transform_indices = @transform_9, window_bounds = array<i64: 16, 256>}]} {
    %c0 = arith.constant 0 : index
    %c0_0 = arith.constant 0 : index
    %0 = vector.load %arg1[%c0, %c0_0] : memref<16x256xf32, #tpu.memory_space<vmem>>, vector<16x256xf32>
    %1 = arith.truncf %0 : vector<16x256xf32> to vector<16x256xbf16>
    %c0_1 = arith.constant 0 : index
    %c0_2 = arith.constant 0 : index
    %2 = vector.load %arg2[%c0_1, %c0_2] : memref<256x512xbf16, #tpu.memory_space<vmem>>, vector<256x512xbf16>
    %cst = arith.constant dense<0.000000e+00> : vector<16x512xf32>
    %3 = tpu.matmul %1, %2, %cst {dimension_numbers = #tpu.dot_dimension_numbers<[1], [0], [0], [1], [0, 0, 1, 1], [], []>} : vector<16x256xbf16>, vector<256x512xbf16>, vector<16x512xf32> -> vector<16x512xf32>
    %c0_3 = arith.constant 0 : index
    %c0_4 = arith.constant 0 : index
    %4 = vector.load %arg3[%c0_3, %c0_4] : memref<1x512xf32, #tpu.memory_space<vmem>>, vector<1x512xf32>
    %5 = vector.broadcast %4 : vector<1x512xf32> to vector<16x512xf32>
    %6 = arith.addf %3, %5 : vector<16x512xf32>
    %cst_5 = arith.constant 0.000000e+00 : f32
    %7 = vector.broadcast %cst_5 : f32 to vector<16x512xf32>
    %8 = arith.maximumf %6, %7 : vector<16x512xf32>
    %9 = arith.truncf %8 : vector<16x512xf32> to vector<16x512xbf16>
    %c0_6 = arith.constant 0 : index
    %c0_7 = arith.constant 0 : index
    %10 = vector.load %arg4[%c0_6, %c0_7] : memref<512x512xbf16, #tpu.memory_space<vmem>>, vector<512x512xbf16>
    %cst_8 = arith.constant dense<0.000000e+00> : vector<16x512xf32>
    %11 = tpu.matmul %9, %10, %cst_8 {dimension_numbers = #tpu.dot_dimension_numbers<[1], [0], [0], [1], [0, 0, 1, 1], [], []>} : vector<16x512xbf16>, vector<512x512xbf16>, vector<16x512xf32> -> vector<16x512xf32>
    %c0_9 = arith.constant 0 : index
    %c0_10 = arith.constant 0 : index
    %12 = vector.load %arg5[%c0_9, %c0_10] : memref<1x512xf32, #tpu.memory_space<vmem>>, vector<1x512xf32>
    %13 = vector.broadcast %12 : vector<1x512xf32> to vector<16x512xf32>
    %14 = arith.addf %11, %13 : vector<16x512xf32>
    %cst_11 = arith.constant 0.000000e+00 : f32
    %15 = vector.broadcast %cst_11 : f32 to vector<16x512xf32>
    %16 = arith.maximumf %14, %15 : vector<16x512xf32>
    %17 = arith.truncf %16 : vector<16x512xf32> to vector<16x512xbf16>
    %c0_12 = arith.constant 0 : index
    %c0_13 = arith.constant 0 : index
    %18 = vector.load %arg6[%c0_12, %c0_13] : memref<512x512xbf16, #tpu.memory_space<vmem>>, vector<512x512xbf16>
    %cst_14 = arith.constant dense<0.000000e+00> : vector<16x512xf32>
    %19 = tpu.matmul %17, %18, %cst_14 {dimension_numbers = #tpu.dot_dimension_numbers<[1], [0], [0], [1], [0, 0, 1, 1], [], []>} : vector<16x512xbf16>, vector<512x512xbf16>, vector<16x512xf32> -> vector<16x512xf32>
    %c0_15 = arith.constant 0 : index
    %c0_16 = arith.constant 0 : index
    %20 = vector.load %arg7[%c0_15, %c0_16] : memref<1x512xf32, #tpu.memory_space<vmem>>, vector<1x512xf32>
    %21 = vector.broadcast %20 : vector<1x512xf32> to vector<16x512xf32>
    %22 = arith.addf %19, %21 : vector<16x512xf32>
    %cst_17 = arith.constant 0.000000e+00 : f32
    %23 = vector.broadcast %cst_17 : f32 to vector<16x512xf32>
    %24 = arith.maximumf %22, %23 : vector<16x512xf32>
    %25 = arith.truncf %24 : vector<16x512xf32> to vector<16x512xbf16>
    %c0_18 = arith.constant 0 : index
    %c0_19 = arith.constant 0 : index
    %26 = vector.load %arg8[%c0_18, %c0_19] : memref<512x256xbf16, #tpu.memory_space<vmem>>, vector<512x256xbf16>
    %cst_20 = arith.constant dense<0.000000e+00> : vector<16x256xf32>
    %27 = tpu.matmul %25, %26, %cst_20 {dimension_numbers = #tpu.dot_dimension_numbers<[1], [0], [0], [1], [0, 0, 1, 1], [], []>} : vector<16x512xbf16>, vector<512x256xbf16>, vector<16x256xf32> -> vector<16x256xf32>
    %c0_21 = arith.constant 0 : index
    %c0_22 = arith.constant 0 : index
    %28 = vector.load %arg9[%c0_21, %c0_22] : memref<1x256xf32, #tpu.memory_space<vmem>>, vector<1x256xf32>
    %29 = vector.broadcast %28 : vector<1x256xf32> to vector<16x256xf32>
    %30 = arith.addf %27, %29 : vector<16x256xf32>
    %cst_23 = arith.constant 0.000000e+00 : f32
    %31 = vector.broadcast %cst_23 : f32 to vector<16x256xf32>
    %32 = arith.subf %31, %30 : vector<16x256xf32>
    %33 = math.exp %32 : vector<16x256xf32>
    %cst_24 = arith.constant 1.000000e+00 : f32
    %34 = vector.broadcast %cst_24 : f32 to vector<16x256xf32>
    %35 = arith.addf %34, %33 : vector<16x256xf32>
    %36 = tpu.reciprocal %35 {approx = true} : vector<16x256xf32> -> vector<16x256xf32>
    %c0_25 = arith.constant 0 : index
    %c0_26 = arith.constant 0 : index
    %37 = vector.load %arg10[%c0_25, %c0_26] : memref<16x256xf32, #tpu.memory_space<vmem>>, vector<16x256xf32>
    tpu.vector_store %arg10[%c0_25, %c0_26], %36 {strides = array<i32>} : memref<16x256xf32, #tpu.memory_space<vmem>>, vector<16x256xf32>,
    return
  }
  func.func @transform_0(%arg0: i32) -> (i32, i32) {
    %c0_i32 = arith.constant 0 : i32
    %c0_i32_0 = arith.constant 0 : i32
    return %arg0, %c0_i32 : i32, i32
  }
  func.func @transform_1(%arg0: i32) -> (i32, i32) {
    %c0_i32 = arith.constant 0 : i32
    %c0_i32_0 = arith.constant 0 : i32
    %c0_i32_1 = arith.constant 0 : i32
    return %c0_i32, %c0_i32_0 : i32, i32
  }
  func.func @transform_2(%arg0: i32) -> (i32, i32) {
    %c0_i32 = arith.constant 0 : i32
    %c0_i32_0 = arith.constant 0 : i32
    %c0_i32_1 = arith.constant 0 : i32
    return %c0_i32, %c0_i32_0 : i32, i32
  }
  func.func @transform_3(%arg0: i32) -> (i32, i32) {
    %c0_i32 = arith.constant 0 : i32
    %c0_i32_0 = arith.constant 0 : i32
    %c0_i32_1 = arith.constant 0 : i32
    return %c0_i32, %c0_i32_0 : i32, i32
  }
  func.func @transform_4(%arg0: i32) -> (i32, i32) {
    %c0_i32 = arith.constant 0 : i32
    %c0_i32_0 = arith.constant 0 : i32
    %c0_i32_1 = arith.constant 0 : i32
    return %c0_i32, %c0_i32_0 : i32, i32
  }
  func.func @transform_5(%arg0: i32) -> (i32, i32) {
    %c0_i32 = arith.constant 0 : i32
    %c0_i32_0 = arith.constant 0 : i32
    %c0_i32_1 = arith.constant 0 : i32
    return %c0_i32, %c0_i32_0 : i32, i32
  }
  func.func @transform_6(%arg0: i32) -> (i32, i32) {
    %c0_i32 = arith.constant 0 : i32
    %c0_i32_0 = arith.constant 0 : i32
    %c0_i32_1 = arith.constant 0 : i32
    return %c0_i32, %c0_i32_0 : i32, i32
  }
  func.func @transform_7(%arg0: i32) -> (i32, i32) {
    %c0_i32 = arith.constant 0 : i32
    %c0_i32_0 = arith.constant 0 : i32
    %c0_i32_1 = arith.constant 0 : i32
    return %c0_i32, %c0_i32_0 : i32, i32
  }
  func.func @transform_8(%arg0: i32) -> (i32, i32) {
    %c0_i32 = arith.constant 0 : i32
    %c0_i32_0 = arith.constant 0 : i32
    %c0_i32_1 = arith.constant 0 : i32
    return %c0_i32, %c0_i32_0 : i32, i32
  }
  func.func @transform_9(%arg0: i32) -> (i32, i32) {
    %c0_i32 = arith.constant 0 : i32
    %c0_i32_0 = arith.constant 0 : i32
    return %arg0, %c0_i32 : i32, i32
  }
}

</mosaic_0001>

<llo_original>
// kernel: tpu_custom_call.1
$region0: #{tpu_custom_call.1}
  #allocation0 [shape = 'u32[]', space=smem, size = 0x4, offset = 0x4, fixed_abs, tag = 'smem constant byte address 0x4 - core index']
  #allocation1 [shape = 'u32[144,128]{1,0:T(1,128)}', space=vmem, size = 0x12000, scoped, tag = 'internal scratch']
  %s0 = inlined_call_operand.hbm [shape: f32[16,256], index: 0, kind: input, shape index: {}]
  %s1 = inlined_call_operand.hbm [shape: bf16[256,512], index: 1, kind: input, shape index: {}]
  %s2 = inlined_call_operand.vmem [shape: f32[1,512], index: 2, kind: input, shape index: {}]
  %s3 = inlined_call_operand.hbm [shape: bf16[512,512], index: 3, kind: input, shape index: {}]
  %s4 = inlined_call_operand.vmem [shape: f32[1,512], index: 4, kind: input, shape index: {}]
  %s5 = inlined_call_operand.hbm [shape: bf16[512,512], index: 5, kind: input, shape index: {}]
  %s6 = inlined_call_operand.vmem [shape: f32[1,512], index: 6, kind: input, shape index: {}]
  %s7 = inlined_call_operand.hbm [shape: bf16[512,256], index: 7, kind: input, shape index: {}]
  %s8 = inlined_call_operand.vmem [shape: f32[1,256], index: 8, kind: input, shape index: {}]
  %s9 = inlined_call_operand.hbm [shape: f32[16,256], index: 9, kind: output, shape index: {}]
  %s10 = sld [smem:[#allocation0]]
  $region66: #{tpu_custom_call.1} parent=0
    _
  %s12 = ssub.s32 1, %s10
  %s13 = scalar_select 0, %s12, %s10
  $region1: #{tpu_custom_call.1} parent=0
    #allocation2 [shape = 'u8[16384]{0}', space=vmem, size = 0x4000, scoped, tag = 'input window, operand 0, single buffered']
    #allocation3 [shape = 's32[1]{0}', space=sflag, size = 0x4, scoped, tag = 'scoped memory for tpu_custom_call.1']
    #allocation4 [shape = 's32[1]{0}', space=sflag, size = 0x4, scoped, tag = 'scoped memory for tpu_custom_call.1']
    #allocation5 [shape = 'u8[262144]{0}', space=vmem, size = 0x40000, scoped, tag = 'input window, operand 1, single buffered']
    #allocation6 [shape = 's32[1]{0}', space=sflag, size = 0x4, scoped, tag = 'scoped memory for tpu_custom_call.1']
    #allocation7 [shape = 'u8[524288]{0}', space=vmem, size = 0x80000, scoped, tag = 'input window, operand 3, single buffered']
    #allocation8 [shape = 'u8[524288]{0}', space=vmem, size = 0x80000, scoped, tag = 'input window, operand 5, single buffered']
    #allocation9 [shape = 's32[1]{0}', space=sflag, size = 0x4, scoped, tag = 'scoped memory for tpu_custom_call.1']
    #allocation10 [shape = 'u8[262144]{0}', space=vmem, size = 0x40000, scoped, tag = 'input window, operand 7, single buffered']
    #allocation11 [shape = 'u8[16384]{0}', space=vmem, size = 0x4000, scoped, tag = 'output window, operand 0, single buffered']
    %14 = vsyncpa [#allocation3], 0
    %15 = vsyncpa [#allocation6], 0
    %16 = vsyncpa [#allocation9], 0
    %17 = vsyncpa [#allocation4], 0
    // Predicated region
    $region2: #{tpu_custom_call.1} parent=1 // pred_check
      _
    $region3: #{tpu_custom_call.1} parent=1 // pred_check_branch
      %19 = sbr.rel (0) target = $region5
    $region4: #{tpu_custom_call.1} parent=1 // pred_region
      %s21 = ssub.s32 512, 512
      %22 = vsyncadd [#allocation3], %s21
      %s23 = sshll.u32 [#allocation2], 4
      %s24 = int_to_ptr.vmem [resolvable:$true] %s23
      %29 = dma.hbm_to_vmem [thread:$0]  %s0, 512, %s24, [#allocation3], 256, 256, 16
    $region5: #{tpu_custom_call.1} parent=1 // pred_fallthru
      _
    // Predicated region
    $region6: #{tpu_custom_call.1} parent=1 // pred_check
      _
    $region7: #{tpu_custom_call.1} parent=1 // pred_check_branch
      %31 = sbr.rel (0) target = $region9
    $region8: #{tpu_custom_call.1} parent=1 // pred_region
      %s33 = ssub.s32 8192, 8192
      %34 = vsyncadd [#allocation6], %s33
      %s35 = sshll.u32 [#allocation5], 4
      %s36 = int_to_ptr.vmem [resolvable:$true] %s35
      %41 = dma.hbm_to_vmem [thread:$0]  %s1, 8192, %s36, [#allocation6], 256, 256, 16
    $region9: #{tpu_custom_call.1} parent=1 // pred_fallthru
      _
    // Predicated region
    $region10: #{tpu_custom_call.1} parent=1 // pred_check
      _
    $region11: #{tpu_custom_call.1} parent=1 // pred_check_branch
      %43 = sbr.rel (0) target = $region13
    $region12: #{tpu_custom_call.1} parent=1 // pred_region
      _
    $region13: #{tpu_custom_call.1} parent=1 // pred_fallthru
      _
    // Predicated region
    $region14: #{tpu_custom_call.1} parent=1 // pred_check
      _
    $region15: #{tpu_custom_call.1} parent=1 // pred_check_branch
      %45 = sbr.rel (0) target = $region17
    $region16: #{tpu_custom_call.1} parent=1 // pred_region
      %s47 = ssub.s32 16384, 16384
      %48 = vsyncadd [#allocation6], %s47
      %s49 = sshll.u32 [#allocation7], 4
      %s50 = int_to_ptr.vmem [resolvable:$true] %s49
      %55 = dma.hbm_to_vmem [thread:$0]  %s3, 16384, %s50, [#allocation6], 256, 256, 16
    $region17: #{tpu_custom_call.1} parent=1 // pred_fallthru
      _
    // Predicated region
    $region18: #{tpu_custom_call.1} parent=1 // pred_check
      _
    $region19: #{tpu_custom_call.1} parent=1 // pred_check_branch
      %57 = sbr.rel (0) target = $region21
    $region20: #{tpu_custom_call.1} parent=1 // pred_region
      _
    $region21: #{tpu_custom_call.1} parent=1 // pred_fallthru
      _
    // Predicated region
    $region22: #{tpu_custom_call.1} parent=1 // pred_check
      _
    $region23: #{tpu_custom_call.1} parent=1 // pred_check_branch
      %59 = sbr.rel (0) target = $region25
    $region24: #{tpu_custom_call.1} parent=1 // pred_region
      %s61 = ssub.s32 16384, 16384
      %62 = vsyncadd [#allocation9], %s61
      %s63 = sshll.u32 [#allocation8], 4
      %s64 = int_to_ptr.vmem [resolvable:$true] %s63
      %69 = dma.hbm_to_vmem [thread:$0]  %s5, 16384, %s64, [#allocation9], 256, 256, 16
    $region25: #{tpu_custom_call.1} parent=1 // pred_fallthru
      _
    // Predicated region
    $region26: #{tpu_custom_call.1} parent=1 // pred_check
      _
    $region27: #{tpu_custom_call.1} parent=1 // pred_check_branch
      %71 = sbr.rel (0) target = $region29
    $region28: #{tpu_custom_call.1} parent=1 // pred_region
      _
    $region29: #{tpu_custom_call.1} parent=1 // pred_fallthru
      _
    // Predicated region
    $region30: #{tpu_custom_call.1} parent=1 // pred_check
      _
    $region31: #{tpu_custom_call.1} parent=1 // pred_check_branch
      %73 = sbr.rel (0) target = $region33
    $region32: #{tpu_custom_call.1} parent=1 // pred_region
      %s75 = ssub.s32 8192, 8192
      %76 = vsyncadd [#allocation9], %s75
      %s77 = sshll.u32 [#allocation10], 4
      %s78 = int_to_ptr.vmem [resolvable:$true] %s77
      %83 = dma.hbm_to_vmem [thread:$0]  %s7, 8192, %s78, [#allocation9], 128, 128, 8
    $region33: #{tpu_custom_call.1} parent=1 // pred_fallthru
      _
    // Predicated region
    $region34: #{tpu_custom_call.1} parent=1 // pred_check
      _
    $region35: #{tpu_custom_call.1} parent=1 // pred_check_branch
      %85 = sbr.rel (0) target = $region37
    $region36: #{tpu_custom_call.1} parent=1 // pred_region
      _
    $region37: #{tpu_custom_call.1} parent=1 // pred_fallthru
      _
    // Predicated region
    $region38: #{tpu_custom_call.1} parent=1 // pred_check
      _
    $region39: #{tpu_custom_call.1} parent=1 // pred_check_branch
      %87 = sbr.rel (0) target = $region41
    $region40: #{tpu_custom_call.1} parent=1 // pred_region
      %88 = dma.done [#allocation3], 512
    $region41: #{tpu_custom_call.1} parent=1 // pred_fallthru
      _
    // Predicated region
    $region42: #{tpu_custom_call.1} parent=1 // pred_check
      _
    $region43: #{tpu_custom_call.1} parent=1 // pred_check_branch
      %90 = sbr.rel (0) target = $region45
    $region44: #{tpu_custom_call.1} parent=1 // pred_region
      %91 = dma.done [#allocation6], 8192
    $region45: #{tpu_custom_call.1} parent=1 // pred_fallthru
      _
    // Predicated region
    $region46: #{tpu_custom_call.1} parent=1 // pred_check
      _
    $region47: #{tpu_custom_call.1} parent=1 // pred_check_branch
      %93 = sbr.rel (0) target = $region49
    $region48: #{tpu_custom_call.1} parent=1 // pred_region
      %94 = dma.done [#allocation6], 16384
    $region49: #{tpu_custom_call.1} parent=1 // pred_fallthru
      _
    // Predicated region
    $region50: #{tpu_custom_call.1} parent=1 // pred_check
      _
    $region51: #{tpu_custom_call.1} parent=1 // pred_check_branch
      %96 = sbr.rel (0) target = $region53
    $region52: #{tpu_custom_call.1} parent=1 // pred_region
      %97 = dma.done [#allocation9], 16384
    $region53: #{tpu_custom_call.1} parent=1 // pred_fallthru
      _
    // Predicated region
    $region54: #{tpu_custom_call.1} parent=1 // pred_check
      _
    $region55: #{tpu_custom_call.1} parent=1 // pred_check_branch
      %99 = sbr.rel (0) target = $region57
    $region56: #{tpu_custom_call.1} parent=1 // pred_region
      %100 = dma.done [#allocation9], 8192
    $region57: #{tpu_custom_call.1} parent=1 // pred_fallthru
      _
    %v101 = vld [vmem:[#allocation2] sm:$0xff]
    %v102 = vld [vmem:[#allocation2 + $0x8] sm:$0xff]
    %v103 = vld [vmem:[#allocation2 + $0x10] sm:$0xff]
    %v104 = vld [vmem:[#allocation2 + $0x18] sm:$0xff]
    %v105 = vpack.c.bf16 %v103, %v101
    %v106 = vpack.c.bf16 %v104, %v102
    %v107 = vld [vmem:[#allocation5] sm:$0xff]
    %v108 = vld [vmem:[#allocation5 + $0x8] sm:$0xff]
    %v109 = vld [vmem:[#allocation5 + $0x10] sm:$0xff]
    %v110 = vld [vmem:[#allocation5 + $0x18] sm:$0xff]
    %v111 = vld [vmem:[#allocation5 + $0x20] sm:$0xff]
    %v112 = vld [vmem:[#allocation5 + $0x28] sm:$0xff]
    %v113 = vld [vmem:[#allocation5 + $0x30] sm:$0xff]
    %v114 = vld [vmem:[#allocation5 + $0x38] sm:$0xff]
    %v115 = vld [vmem:[#allocation5 + $0x40] sm:$0xff]
    %v116 = vld [vmem:[#allocation5 + $0x48] sm:$0xff]
    %v117 = vld [vmem:[#allocation5 + $0x50] sm:$0xff]
    %v118 = vld [vmem:[#allocation5 + $0x58] sm:$0xff]
    %v119 = vld [vmem:[#allocation5 + $0x60] sm:$0xff]
    %v120 = vld [vmem:[#allocation5 + $0x68] sm:$0xff]
    %v121 = vld [vmem:[#allocation5 + $0x70] sm:$0xff]
    %v122 = vld [vmem:[#allocation5 + $0x78] sm:$0xff]
    %v123 = vld [vmem:[#allocation5 + $0x80] sm:$0xff]
    %v124 = vld [vmem:[#allocation5 + $0x88] sm:$0xff]
    %v125 = vld [vmem:[#allocation5 + $0x90] sm:$0xff]
    %v126 = vld [vmem:[#allocation5 + $0x98] sm:$0xff]
    %v127 = vld [vmem:[#allocation5 + $0xa0] sm:$0xff]
    %v128 = vld [vmem:[#allocation5 + $0xa8] sm:$0xff]
    %v129 = vld [vmem:[#allocation5 + $0xb0] sm:$0xff]
    %v130 = vld [vmem:[#allocation5 + $0xb8] sm:$0xff]
    %v131 = vld [vmem:[#allocation5 + $0xc0] sm:$0xff]
    %v132 = vld [vmem:[#allocation5 + $0xc8] sm:$0xff]
    %v133 = vld [vmem:[#allocation5 + $0xd0] sm:$0xff]
    %v134 = vld [vmem:[#allocation5 + $0xd8] sm:$0xff]
    %v135 = vld [vmem:[#allocation5 + $0xe0] sm:$0xff]
    %v136 = vld [vmem:[#allocation5 + $0xe8] sm:$0xff]
    %v137 = vld [vmem:[#allocation5 + $0xf0] sm:$0xff]
    %v138 = vld [vmem:[#allocation5 + $0xf8] sm:$0xff]
    %v139 = vld [vmem:[#allocation5 + $0x100] sm:$0xff]
    %v140 = vld [vmem:[#allocation5 + $0x108] sm:$0xff]
    %v141 = vld [vmem:[#allocation5 + $0x110] sm:$0xff]
    %v142 = vld [vmem:[#allocation5 + $0x118] sm:$0xff]
    %v143 = vld [vmem:[#allocation5 + $0x120] sm:$0xff]
    %v144 = vld [vmem:[#allocation5 + $0x128] sm:$0xff]
    %v145 = vld [vmem:[#allocation5 + $0x130] sm:$0xff]
    %v146 = vld [vmem:[#allocation5 + $0x138] sm:$0xff]
    %v147 = vld [vmem:[#allocation5 + $0x140] sm:$0xff]
    %v148 = vld [vmem:[#allocation5 + $0x148] sm:$0xff]
    %v149 = vld [vmem:[#allocation5 + $0x150] sm:$0xff]
    %v150 = vld [vmem:[#allocation5 + $0x158] sm:$0xff]
    %v151 = vld [vmem:[#allocation5 + $0x160] sm:$0xff]
    %v152 = vld [vmem:[#allocation5 + $0x168] sm:$0xff]
    %v153 = vld [vmem:[#allocation5 + $0x170] sm:$0xff]
    %v154 = vld [vmem:[#allocation5 + $0x178] sm:$0xff]
    %v155 = vld [vmem:[#allocation5 + $0x180] sm:$0xff]
    %v156 = vld [vmem:[#allocation5 + $0x188] sm:$0xff]
    %v157 = vld [vmem:[#allocation5 + $0x190] sm:$0xff]
    %v158 = vld [vmem:[#allocation5 + $0x198] sm:$0xff]
    %v159 = vld [vmem:[#allocation5 + $0x1a0] sm:$0xff]
    %v160 = vld [vmem:[#allocation5 + $0x1a8] sm:$0xff]
    %v161 = vld [vmem:[#allocation5 + $0x1b0] sm:$0xff]
    %v162 = vld [vmem:[#allocation5 + $0x1b8] sm:$0xff]
    %v163 = vld [vmem:[#allocation5 + $0x1c0] sm:$0xff]
    %v164 = vld [vmem:[#allocation5 + $0x1c8] sm:$0xff]
    %v165 = vld [vmem:[#allocation5 + $0x1d0] sm:$0xff]
    %v166 = vld [vmem:[#allocation5 + $0x1d8] sm:$0xff]
    %v167 = vld [vmem:[#allocation5 + $0x1e0] sm:$0xff]
    %v168 = vld [vmem:[#allocation5 + $0x1e8] sm:$0xff]
    %v169 = vld [vmem:[#allocation5 + $0x1f0] sm:$0xff]
    %v170 = vld [vmem:[#allocation5 + $0x1f8] sm:$0xff]
    %v171 = vld [vmem:[%s2] sm:$0xf]
    %v173 = vlaneseq
    %v174 = vshrl.u32 %v173, 7
    %v175 = vsub.s32 0, %v174
    %v176 = vrot.slane %v171, %v175
    %v177 = vlaneseq
    %v178 = vshrl.u32 %v177, 7
    %v179 = vsub.s32 1, %v178
    %v180 = vrot.slane %v171, %v179
    %v181 = vlaneseq
    %v182 = vshrl.u32 %v181, 7
    %v183 = vsub.s32 2, %v182
    %v184 = vrot.slane %v171, %v183
    %v185 = vlaneseq
    %v186 = vshrl.u32 %v185, 7
    %v187 = vsub.s32 3, %v186
    %v188 = vrot.slane %v171, %v187
    %v257 = vunpack.c.l.b16 %v107
    %v258 = vunpack.c.h.b16 %v107
    %v259 = vunpack.c.l.b16 %v108
    %v260 = vunpack.c.h.b16 %v108
    %v261 = vunpack.c.l.b16 %v109
    %v262 = vunpack.c.h.b16 %v109
    %v263 = vunpack.c.l.b16 %v110
    %v264 = vunpack.c.h.b16 %v110
    %v265 = vunpack.c.l.b16 %v111
    %v266 = vunpack.c.h.b16 %v111
    %v267 = vunpack.c.l.b16 %v112
    %v268 = vunpack.c.h.b16 %v112
    %v269 = vunpack.c.l.b16 %v113
    %v270 = vunpack.c.h.b16 %v113
    %v271 = vunpack.c.l.b16 %v114
    %v272 = vunpack.c.h.b16 %v114
    %v273 = vunpack.c.l.b16 %v115
    %v274 = vunpack.c.h.b16 %v115
    %v275 = vunpack.c.l.b16 %v116
    %v276 = vunpack.c.h.b16 %v116
    %v277 = vunpack.c.l.b16 %v117
    %v278 = vunpack.c.h.b16 %v117
    %v279 = vunpack.c.l.b16 %v118
    %v280 = vunpack.c.h.b16 %v118
    %v281 = vunpack.c.l.b16 %v119
    %v282 = vunpack.c.h.b16 %v119
    %v283 = vunpack.c.l.b16 %v120
    %v284 = vunpack.c.h.b16 %v120
    %v285 = vunpack.c.l.b16 %v121
    %v286 = vunpack.c.h.b16 %v121
    %v287 = vunpack.c.l.b16 %v122
    %v288 = vunpack.c.h.b16 %v122
    %v289 = vunpack.c.l.b16 %v123
    %v290 = vunpack.c.h.b16 %v123
    %v291 = vunpack.c.l.b16 %v124
    %v292 = vunpack.c.h.b16 %v124
    %v293 = vunpack.c.l.b16 %v125
    %v294 = vunpack.c.h.b16 %v125
    %v295 = vunpack.c.l.b16 %v126
    %v296 = vunpack.c.h.b16 %v126
    %v297 = vunpack.c.l.b16 %v127
    %v298 = vunpack.c.h.b16 %v127
    %v299 = vunpack.c.l.b16 %v128
    %v300 = vunpack.c.h.b16 %v128
    %v301 = vunpack.c.l.b16 %v129
    %v302 = vunpack.c.h.b16 %v129
    %v303 = vunpack.c.l.b16 %v130
    %v304 = vunpack.c.h.b16 %v130
    %v305 = vunpack.c.l.b16 %v131
    %v306 = vunpack.c.h.b16 %v131
    %v307 = vunpack.c.l.b16 %v132
    %v308 = vunpack.c.h.b16 %v132
    %v309 = vunpack.c.l.b16 %v133
    %v310 = vunpack.c.h.b16 %v133
    %v311 = vunpack.c.l.b16 %v134
    %v312 = vunpack.c.h.b16 %v134
    %v313 = vunpack.c.l.b16 %v135
    %v314 = vunpack.c.h.b16 %v135
    %v315 = vunpack.c.l.b16 %v136
    %v316 = vunpack.c.h.b16 %v136
    %v317 = vunpack.c.l.b16 %v137
    %v318 = vunpack.c.h.b16 %v137
    %v319 = vunpack.c.l.b16 %v138
    %v320 = vunpack.c.h.b16 %v138
    %v321 = vunpack.c.l.b16 %v139
    %v322 = vunpack.c.h.b16 %v139
    %v323 = vunpack.c.l.b16 %v140
    %v324 = vunpack.c.h.b16 %v140
    %v325 = vunpack.c.l.b16 %v141
    %v326 = vunpack.c.h.b16 %v141
    %v327 = vunpack.c.l.b16 %v142
    %v328 = vunpack.c.h.b16 %v142
    %v329 = vunpack.c.l.b16 %v143
    %v330 = vunpack.c.h.b16 %v143
    %v331 = vunpack.c.l.b16 %v144
    %v332 = vunpack.c.h.b16 %v144
    %v333 = vunpack.c.l.b16 %v145
    %v334 = vunpack.c.h.b16 %v145
    %v335 = vunpack.c.l.b16 %v146
    %v336 = vunpack.c.h.b16 %v146
    %v337 = vunpack.c.l.b16 %v147
    %v338 = vunpack.c.h.b16 %v147
    %v339 = vunpack.c.l.b16 %v148
    %v340 = vunpack.c.h.b16 %v148
    %v341 = vunpack.c.l.b16 %v149
    %v342 = vunpack.c.h.b16 %v149
    %v343 = vunpack.c.l.b16 %v150
    %v344 = vunpack.c.h.b16 %v150
    %v345 = vunpack.c.l.b16 %v151
    %v346 = vunpack.c.h.b16 %v151
    %v347 = vunpack.c.l.b16 %v152
    %v348 = vunpack.c.h.b16 %v152
    %v349 = vunpack.c.l.b16 %v153
    %v350 = vunpack.c.h.b16 %v153
    %v351 = vunpack.c.l.b16 %v154
    %v352 = vunpack.c.h.b16 %v154
    %v353 = vunpack.c.l.b16 %v155
    %v354 = vunpack.c.h.b16 %v155
    %v355 = vunpack.c.l.b16 %v156
    %v356 = vunpack.c.h.b16 %v156
    %v357 = vunpack.c.l.b16 %v157
    %v358 = vunpack.c.h.b16 %v157
    %v359 = vunpack.c.l.b16 %v158
    %v360 = vunpack.c.h.b16 %v158
    %v361 = vunpack.c.l.b16 %v159
    %v362 = vunpack.c.h.b16 %v159
    %v363 = vunpack.c.l.b16 %v160
    %v364 = vunpack.c.h.b16 %v160
    %v365 = vunpack.c.l.b16 %v161
    %v366 = vunpack.c.h.b16 %v161
    %v367 = vunpack.c.l.b16 %v162
    %v368 = vunpack.c.h.b16 %v162
    %v369 = vunpack.c.l.b16 %v163
    %v370 = vunpack.c.h.b16 %v163
    %v371 = vunpack.c.l.b16 %v164
    %v372 = vunpack.c.h.b16 %v164
    %v373 = vunpack.c.l.b16 %v165
    %v374 = vunpack.c.h.b16 %v165
    %v375 = vunpack.c.l.b16 %v166
    %v376 = vunpack.c.h.b16 %v166
    %v377 = vunpack.c.l.b16 %v167
    %v378 = vunpack.c.h.b16 %v167
    %v379 = vunpack.c.l.b16 %v168
    %v380 = vunpack.c.h.b16 %v168
    %v381 = vunpack.c.l.b16 %v169
    %v382 = vunpack.c.h.b16 %v169
    %v383 = vunpack.c.l.b16 %v170
    %v384 = vunpack.c.h.b16 %v170
    %v385 = vpack.c.b16 %v261, %v257
    %v386 = vpack.c.b16 %v262, %v258
    %v387 = vpack.c.b16 %v263, %v259
    %v388 = vpack.c.b16 %v264, %v260
    %v389 = vpack.c.b16 %v269, %v265
    %v390 = vpack.c.b16 %v270, %v266
    %v391 = vpack.c.b16 %v271, %v267
    %v392 = vpack.c.b16 %v272, %v268
    %v393 = vpack.c.b16 %v277, %v273
    %v394 = vpack.c.b16 %v278, %v274
    %v395 = vpack.c.b16 %v279, %v275
    %v396 = vpack.c.b16 %v280, %v276
    %v397 = vpack.c.b16 %v285, %v281
    %v398 = vpack.c.b16 %v286, %v282
    %v399 = vpack.c.b16 %v287, %v283
    %v400 = vpack.c.b16 %v288, %v284
    %v401 = vpack.c.b16 %v293, %v289
    %v402 = vpack.c.b16 %v294, %v290
    %v403 = vpack.c.b16 %v295, %v291
    %v404 = vpack.c.b16 %v296, %v292
    %v405 = vpack.c.b16 %v301, %v297
    %v406 = vpack.c.b16 %v302, %v298
    %v407 = vpack.c.b16 %v303, %v299
    %v408 = vpack.c.b16 %v304, %v300
    %v409 = vpack.c.b16 %v309, %v305
    %v410 = vpack.c.b16 %v310, %v306
    %v411 = vpack.c.b16 %v311, %v307
    %v412 = vpack.c.b16 %v312, %v308
    %v413 = vpack.c.b16 %v317, %v313
    %v414 = vpack.c.b16 %v318, %v314
    %v415 = vpack.c.b16 %v319, %v315
    %v416 = vpack.c.b16 %v320, %v316
    %v417 = vpack.c.b16 %v325, %v321
    %v418 = vpack.c.b16 %v326, %v322
    %v419 = vpack.c.b16 %v327, %v323
    %v420 = vpack.c.b16 %v328, %v324
    %v421 = vpack.c.b16 %v333, %v329
    %v422 = vpack.c.b16 %v334, %v330
    %v423 = vpack.c.b16 %v335, %v331
    %v424 = vpack.c.b16 %v336, %v332
    %v425 = vpack.c.b16 %v341, %v337
    %v426 = vpack.c.b16 %v342, %v338
    %v427 = vpack.c.b16 %v343, %v339
    %v428 = vpack.c.b16 %v344, %v340
    %v429 = vpack.c.b16 %v349, %v345
    %v430 = vpack.c.b16 %v350, %v346
    %v431 = vpack.c.b16 %v351, %v347
    %v432 = vpack.c.b16 %v352, %v348
    %v433 = vpack.c.b16 %v357, %v353
    %v434 = vpack.c.b16 %v358, %v354
    %v435 = vpack.c.b16 %v359, %v355
    %v436 = vpack.c.b16 %v360, %v356
    %v437 = vpack.c.b16 %v365, %v361
    %v438 = vpack.c.b16 %v366, %v362
    %v439 = vpack.c.b16 %v367, %v363
    %v440 = vpack.c.b16 %v368, %v364
    %v441 = vpack.c.b16 %v373, %v369
    %v442 = vpack.c.b16 %v374, %v370
    %v443 = vpack.c.b16 %v375, %v371
    %v444 = vpack.c.b16 %v376, %v372
    %v445 = vpack.c.b16 %v381, %v377
    %v446 = vpack.c.b16 %v382, %v378
    %v447 = vpack.c.b16 %v383, %v379
    %v448 = vpack.c.b16 %v384, %v380
    %513 = vmatprep.subr.bf16.mxu0 %v386
    %514 = vmatpush1.bf16.msra.mxu0 %v385
    %515 = vmatprep.subr.bf16.mxu0 %v390
    %516 = vmatpush1.bf16.msra.mxu0 %v389
    %517 = vmatprep.subr.bf16.mxu0 %v394
    %518 = vmatpush1.bf16.msra.mxu0 %v393
    %519 = vmatprep.subr.bf16.mxu0 %v398
    %520 = vmatpush1.bf16.msra.mxu0 %v397
    %521 = vmatprep.subr.bf16.mxu0 %v402
    %522 = vmatpush1.bf16.msra.mxu0 %v401
    %523 = vmatprep.subr.bf16.mxu0 %v406
    %524 = vmatpush1.bf16.msra.mxu0 %v405
    %525 = vmatprep.subr.bf16.mxu0 %v410
    %526 = vmatpush1.bf16.msra.mxu0 %v409
    %527 = vmatprep.subr.bf16.mxu0 %v414
    %528 = vmatpush1.bf16.msra.mxu0 %v413
    %529 = vmatprep.subr.bf16.mxu0 %v418
    %530 = vmatpush1.bf16.msra.mxu0 %v417
    %531 = vmatprep.subr.bf16.mxu0 %v422
    %532 = vmatpush1.bf16.msra.mxu0 %v421
    %533 = vmatprep.subr.bf16.mxu0 %v426
    %534 = vmatpush1.bf16.msra.mxu0 %v425
    %535 = vmatprep.subr.bf16.mxu0 %v430
    %536 = vmatpush1.bf16.msra.mxu0 %v429
    %537 = vmatprep.subr.bf16.mxu0 %v434
    %538 = vmatpush1.bf16.msra.mxu0 %v433
    %539 = vmatprep.subr.bf16.mxu0 %v438
    %540 = vmatpush1.bf16.msra.mxu0 %v437
    %541 = vmatprep.subr.bf16.mxu0 %v442
    %542 = vmatpush1.bf16.msra.mxu0 %v441
    %543 = vmatprep.subr.bf16.mxu0 %v446
    %544 = vmatpush1.bf16.msra.mxu0 %v445
    %545 = vmatprep.mubr.bf16.mxu0 %v106
    %546 = vmatmul.mubr.bf16.gmra.mrb[0].mxu0 %v105
    %v547 = vpop.f32.mrb[0].mxu0
    %v548 = vadd.f32 %v176, %v547
    %v549 = vpop.f32.mrb[0].mxu0
    %v550 = vadd.f32 %v180, %v549
    %v551 = vpop.f32.mrb[0].mxu0
    %v552 = vadd.f32 %v176, %v551
    %v553 = vpop.f32.mrb[0].mxu0
    %v554 = vadd.f32 %v180, %v553
    %555 = vdwg.mxu0
    %556 = vmatprep.subr.bf16.mxu0 %v388
    %557 = vmatpush1.bf16.msra.mxu0 %v387
    %558 = vmatprep.subr.bf16.mxu0 %v392
    %559 = vmatpush1.bf16.msra.mxu0 %v391
    %560 = vmatprep.subr.bf16.mxu0 %v396
    %561 = vmatpush1.bf16.msra.mxu0 %v395
    %562 = vmatprep.subr.bf16.mxu0 %v400
    %563 = vmatpush1.bf16.msra.mxu0 %v399
    %564 = vmatprep.subr.bf16.mxu0 %v404
    %565 = vmatpush1.bf16.msra.mxu0 %v403
    %566 = vmatprep.subr.bf16.mxu0 %v408
    %567 = vmatpush1.bf16.msra.mxu0 %v407
    %568 = vmatprep.subr.bf16.mxu0 %v412
    %569 = vmatpush1.bf16.msra.mxu0 %v411
    %570 = vmatprep.subr.bf16.mxu0 %v416
    %571 = vmatpush1.bf16.msra.mxu0 %v415
    %572 = vmatprep.subr.bf16.mxu0 %v420
    %573 = vmatpush1.bf16.msra.mxu0 %v419
    %574 = vmatprep.subr.bf16.mxu0 %v424
    %575 = vmatpush1.bf16.msra.mxu0 %v423
    %576 = vmatprep.subr.bf16.mxu0 %v428
    %577 = vmatpush1.bf16.msra.mxu0 %v427
    %578 = vmatprep.subr.bf16.mxu0 %v432
    %579 = vmatpush1.bf16.msra.mxu0 %v431
    %580 = vmatprep.subr.bf16.mxu0 %v436
    %581 = vmatpush1.bf16.msra.mxu0 %v435
    %582 = vmatprep.subr.bf16.mxu0 %v440
    %583 = vmatpush1.bf16.msra.mxu0 %v439
    %584 = vmatprep.subr.bf16.mxu0 %v444
    %585 = vmatpush1.bf16.msra.mxu0 %v443
    %586 = vmatprep.subr.bf16.mxu0 %v448
    %587 = vmatpush1.bf16.msra.mxu0 %v447
    %588 = vmatprep.mubr.bf16.mxu0 %v106
    %589 = vmatmul.mubr.bf16.gmra.mrb[0].mxu0 %v105
    %v590 = vpop.f32.mrb[0].mxu0
    %v591 = vadd.f32 %v184, %v590
    %v592 = vpop.f32.mrb[0].mxu0
    %v593 = vadd.f32 %v188, %v592
    %v594 = vpop.f32.mrb[0].mxu0
    %v595 = vadd.f32 %v184, %v594
    %v596 = vpop.f32.mrb[0].mxu0
    %v597 = vadd.f32 %v188, %v596
    %598 = vdwg.mxu0
    %v599 = vmax.f32 %v548, 0.0
    %v600 = vmax.f32 %v550, 0.0
    %v601 = vmax.f32 %v591, 0.0
    %v602 = vmax.f32 %v593, 0.0
    %v603 = vmax.f32 %v552, 0.0
    %v604 = vmax.f32 %v554, 0.0
    %v605 = vmax.f32 %v595, 0.0
    %v606 = vmax.f32 %v597, 0.0
    %v607 = vpack.c.bf16 %v603, %v599
    %v608 = vpack.c.bf16 %v604, %v600
    %v609 = vpack.c.bf16 %v605, %v601
    %v610 = vpack.c.bf16 %v606, %v602
    %v611 = vld [vmem:[#allocation7] sm:$0xff]
    %v612 = vld [vmem:[#allocation7 + $0x8] sm:$0xff]
    %v613 = vld [vmem:[#allocation7 + $0x10] sm:$0xff]
    %v614 = vld [vmem:[#allocation7 + $0x18] sm:$0xff]
    %v615 = vld [vmem:[#allocation7 + $0x20] sm:$0xff]
    %v616 = vld [vmem:[#allocation7 + $0x28] sm:$0xff]
    %v617 = vld [vmem:[#allocation7 + $0x30] sm:$0xff]
    %v618 = vld [vmem:[#allocation7 + $0x38] sm:$0xff]
    %v619 = vld [vmem:[#allocation7 + $0x40] sm:$0xff]
    %v620 = vld [vmem:[#allocation7 + $0x48] sm:$0xff]
    %v621 = vld [vmem:[#allocation7 + $0x50] sm:$0xff]
    %v622 = vld [vmem:[#allocation7 + $0x58] sm:$0xff]
    %v623 = vld [vmem:[#allocation7 + $0x60] sm:$0xff]
    %v624 = vld [vmem:[#allocation7 + $0x68] sm:$0xff]
    %v625 = vld [vmem:[#allocation7 + $0x70] sm:$0xff]
    %v626 = vld [vmem:[#allocation7 + $0x78] sm:$0xff]
    %v627 = vld [vmem:[#allocation7 + $0x80] sm:$0xff]
    %v628 = vld [vmem:[#allocation7 + $0x88] sm:$0xff]
    %v629 = vld [vmem:[#allocation7 + $0x90] sm:$0xff]
    %v630 = vld [vmem:[#allocation7 + $0x98] sm:$0xff]
    %v631 = vld [vmem:[#allocation7 + $0xa0] sm:$0xff]
    %v632 = vld [vmem:[#allocation7 + $0xa8] sm:$0xff]
    %v633 = vld [vmem:[#allocation7 + $0xb0] sm:$0xff]
    %v634 = vld [vmem:[#allocation7 + $0xb8] sm:$0xff]
    %v635 = vld [vmem:[#allocation7 + $0xc0] sm:$0xff]
    %v636 = vld [vmem:[#allocation7 + $0xc8] sm:$0xff]
    %v637 = vld [vmem:[#allocation7 + $0xd0] sm:$0xff]
    %v638 = vld [vmem:[#allocation7 + $0xd8] sm:$0xff]
    %v639 = vld [vmem:[#allocation7 + $0xe0] sm:$0xff]
    %v640 = vld [vmem:[#allocation7 + $0xe8] sm:$0xff]
    %v641 = vld [vmem:[#allocation7 + $0xf0] sm:$0xff]
    %v642 = vld [vmem:[#allocation7 + $0xf8] sm:$0xff]
    %v643 = vld [vmem:[#allocation7 + $0x100] sm:$0xff]
    %v644 = vld [vmem:[#allocation7 + $0x108] sm:$0xff]
    %v645 = vld [vmem:[#allocation7 + $0x110] sm:$0xff]
    %v646 = vld [vmem:[#allocation7 + $0x118] sm:$0xff]
    %v647 = vld [vmem:[#allocation7 + $0x120] sm:$0xff]
    %v648 = vld [vmem:[#allocation7 + $0x128] sm:$0xff]
    %v649 = vld [vmem:[#allocation7 + $0x130] sm:$0xff]
    %v650 = vld [vmem:[#allocation7 + $0x138] sm:$0xff]
    %v651 = vld [vmem:[#allocation7 + $0x140] sm:$0xff]
    %v652 = vld [vmem:[#allocation7 + $0x148] sm:$0xff]
    %v653 = vld [vmem:[#allocation7 + $0x150] sm:$0xff]
    %v654 = vld [vmem:[#allocation7 + $0x158] sm:$0xff]
    %v655 = vld [vmem:[#allocation7 + $0x160] sm:$0xff]
    %v656 = vld [vmem:[#allocation7 + $0x168] sm:$0xff]
    %v657 = vld [vmem:[#allocation7 + $0x170] sm:$0xff]
    %v658 = vld [vmem:[#allocation7 + $0x178] sm:$0xff]
    %v659 = vld [vmem:[#allocation7 + $0x180] sm:$0xff]
    %v660 = vld [vmem:[#allocation7 + $0x188] sm:$0xff]
    %v661 = vld [vmem:[#allocation7 + $0x190] sm:$0xff]
    %v662 = vld [vmem:[#allocation7 + $0x198] sm:$0xff]
    %v663 = vld [vmem:[#allocation7 + $0x1a0] sm:$0xff]
    %v664 = vld [vmem:[#allocation7 + $0x1a8] sm:$0xff]
    %v665 = vld [vmem:[#allocation7 + $0x1b0] sm:$0xff]
    %v666 = vld [vmem:[#allocation7 + $0x1b8] sm:$0xff]
    %v667 = vld [vmem:[#allocation7 + $0x1c0] sm:$0xff]
    %v668 = vld [vmem:[#allocation7 + $0x1c8] sm:$0xff]
    %v669 = vld [vmem:[#allocation7 + $0x1d0] sm:$0xff]
    %v670 = vld [vmem:[#allocation7 + $0x1d8] sm:$0xff]
    %v671 = vld [vmem:[#allocation7 + $0x1e0] sm:$0xff]
    %v672 = vld [vmem:[#allocation7 + $0x1e8] sm:$0xff]
    %v673 = vld [vmem:[#allocation7 + $0x1f0] sm:$0xff]
    %v674 = vld [vmem:[#allocation7 + $0x1f8] sm:$0xff]
    %v675 = vld [vmem:[#allocation7 + $0x200] sm:$0xff]
    %v676 = vld [vmem:[#allocation7 + $0x208] sm:$0xff]
    %v677 = vld [vmem:[#allocation7 + $0x210] sm:$0xff]
    %v678 = vld [vmem:[#allocation7 + $0x218] sm:$0xff]
    %v679 = vld [vmem:[#allocation7 + $0x220] sm:$0xff]
    %v680 = vld [vmem:[#allocation7 + $0x228] sm:$0xff]
    %v681 = vld [vmem:[#allocation7 + $0x230] sm:$0xff]
    %v682 = vld [vmem:[#allocation7 + $0x238] sm:$0xff]
    %v683 = vld [vmem:[#allocation7 + $0x240] sm:$0xff]
    %v684 = vld [vmem:[#allocation7 + $0x248] sm:$0xff]
    %v685 = vld [vmem:[#allocation7 + $0x250] sm:$0xff]
    %v686 = vld [vmem:[#allocation7 + $0x258] sm:$0xff]
    %v687 = vld [vmem:[#allocation7 + $0x260] sm:$0xff]
    %v688 = vld [vmem:[#allocation7 + $0x268] sm:$0xff]
    %v689 = vld [vmem:[#allocation7 + $0x270] sm:$0xff]
    %v690 = vld [vmem:[#allocation7 + $0x278] sm:$0xff]
    %v691 = vld [vmem:[#allocation7 + $0x280] sm:$0xff]
    %v692 = vld [vmem:[#allocation7 + $0x288] sm:$0xff]
    %v693 = vld [vmem:[#allocation7 + $0x290] sm:$0xff]
    %v694 = vld [vmem:[#allocation7 + $0x298] sm:$0xff]
    %v695 = vld [vmem:[#allocation7 + $0x2a0] sm:$0xff]
    %v696 = vld [vmem:[#allocation7 + $0x2a8] sm:$0xff]
    %v697 = vld [vmem:[#allocation7 + $0x2b0] sm:$0xff]
    %v698 = vld [vmem:[#allocation7 + $0x2b8] sm:$0xff]
    %v699 = vld [vmem:[#allocation7 + $0x2c0] sm:$0xff]
    %v700 = vld [vmem:[#allocation7 + $0x2c8] sm:$0xff]
    %v701 = vld [vmem:[#allocation7 + $0x2d0] sm:$0xff]
    %v702 = vld [vmem:[#allocation7 + $0x2d8] sm:$0xff]
    %v703 = vld [vmem:[#allocation7 + $0x2e0] sm:$0xff]
    %v704 = vld [vmem:[#allocation7 + $0x2e8] sm:$0xff]
    %v705 = vld [vmem:[#allocation7 + $0x2f0] sm:$0xff]
    %v706 = vld [vmem:[#allocation7 + $0x2f8] sm:$0xff]
    %v707 = vld [vmem:[#allocation7 + $0x300] sm:$0xff]
    %v708 = vld [vmem:[#allocation7 + $0x308] sm:$0xff]
    %v709 = vld [vmem:[#allocation7 + $0x310] sm:$0xff]
    %v710 = vld [vmem:[#allocation7 + $0x318] sm:$0xff]
    %v711 = vld [vmem:[#allocation7 + $0x320] sm:$0xff]
    %v712 = vld [vmem:[#allocation7 + $0x328] sm:$0xff]
    %v713 = vld [vmem:[#allocation7 + $0x330] sm:$0xff]
    %v714 = vld [vmem:[#allocation7 + $0x338] sm:$0xff]
    %v715 = vld [vmem:[#allocation7 + $0x340] sm:$0xff]
    %v716 = vld [vmem:[#allocation7 + $0x348] sm:$0xff]
    %v717 = vld [vmem:[#allocation7 + $0x350] sm:$0xff]
    %v718 = vld [vmem:[#allocation7 + $0x358] sm:$0xff]
    %v719 = vld [vmem:[#allocation7 + $0x360] sm:$0xff]
    %v720 = vld [vmem:[#allocation7 + $0x368] sm:$0xff]
    %v721 = vld [vmem:[#allocation7 + $0x370] sm:$0xff]
    %v722 = vld [vmem:[#allocation7 + $0x378] sm:$0xff]
    %v723 = vld [vmem:[#allocation7 + $0x380] sm:$0xff]
    %v724 = vld [vmem:[#allocation7 + $0x388] sm:$0xff]
    %v725 = vld [vmem:[#allocation7 + $0x390] sm:$0xff]
    %v726 = vld [vmem:[#allocation7 + $0x398] sm:$0xff]
    %v727 = vld [vmem:[#allocation7 + $0x3a0] sm:$0xff]
    %v728 = vld [vmem:[#allocation7 + $0x3a8] sm:$0xff]
    %v729 = vld [vmem:[#allocation7 + $0x3b0] sm:$0xff]
    %v730 = vld [vmem:[#allocation7 + $0x3b8] sm:$0xff]
    %v731 = vld [vmem:[#allocation7 + $0x3c0] sm:$0xff]
    %v732 = vld [vmem:[#allocation7 + $0x3c8] sm:$0xff]
    %v733 = vld [vmem:[#allocation7 + $0x3d0] sm:$0xff]
    %v734 = vld [vmem:[#allocation7 + $0x3d8] sm:$0xff]
    %v735 = vld [vmem:[#allocation7 + $0x3e0] sm:$0xff]
    %v736 = vld [vmem:[#allocation7 + $0x3e8] sm:$0xff]
    %v737 = vld [vmem:[#allocation7 + $0x3f0] sm:$0xff]
    %v738 = vld [vmem:[#allocation7 + $0x3f8] sm:$0xff]
    %v739 = vld [vmem:[%s4] sm:$0xf]
    %v741 = vlaneseq
    %v742 = vshrl.u32 %v741, 7
    %v743 = vsub.s32 0, %v742
    %v744 = vrot.slane %v739, %v743
    %v745 = vlaneseq
    %v746 = vshrl.u32 %v745, 7
    %v747 = vsub.s32 1, %v746
    %v748 = vrot.slane %v739, %v747
    %v749 = vlaneseq
    %v750 = vshrl.u32 %v749, 7
    %v751 = vsub.s32 2, %v750
    %v752 = vrot.slane %v739, %v751
    %v753 = vlaneseq
    %v754 = vshrl.u32 %v753, 7
    %v755 = vsub.s32 3, %v754
    %v756 = vrot.slane %v739, %v755
    %v889 = vunpack.c.l.b16 %v611
    %v890 = vunpack.c.h.b16 %v611
    %v891 = vunpack.c.l.b16 %v612
    %v892 = vunpack.c.h.b16 %v612
    %v893 = vunpack.c.l.b16 %v613
    %v894 = vunpack.c.h.b16 %v613
    %v895 = vunpack.c.l.b16 %v614
    %v896 = vunpack.c.h.b16 %v614
    %v897 = vunpack.c.l.b16 %v615
    %v898 = vunpack.c.h.b16 %v615
    %v899 = vunpack.c.l.b16 %v616
    %v900 = vunpack.c.h.b16 %v616
    %v901 = vunpack.c.l.b16 %v617
    %v902 = vunpack.c.h.b16 %v617
    %v903 = vunpack.c.l.b16 %v618
    %v904 = vunpack.c.h.b16 %v618
    %v905 = vunpack.c.l.b16 %v619
    %v906 = vunpack.c.h.b16 %v619
    %v907 = vunpack.c.l.b16 %v620
    %v908 = vunpack.c.h.b16 %v620
    %v909 = vunpack.c.l.b16 %v621
    %v910 = vunpack.c.h.b16 %v621
    %v911 = vunpack.c.l.b16 %v622
    %v912 = vunpack.c.h.b16 %v622
    %v913 = vunpack.c.l.b16 %v623
    %v914 = vunpack.c.h.b16 %v623
    %v915 = vunpack.c.l.b16 %v624
    %v916 = vunpack.c.h.b16 %v624
    %v917 = vunpack.c.l.b16 %v625
    %v918 = vunpack.c.h.b16 %v625
    %v919 = vunpack.c.l.b16 %v626
    %v920 = vunpack.c.h.b16 %v626
    %v921 = vunpack.c.l.b16 %v627
    %v922 = vunpack.c.h.b16 %v627
    %v923 = vunpack.c.l.b16 %v628
    %v924 = vunpack.c.h.b16 %v628
    %v925 = vunpack.c.l.b16 %v629
    %v926 = vunpack.c.h.b16 %v629
    %v927 = vunpack.c.l.b16 %v630
    %v928 = vunpack.c.h.b16 %v630
    %v929 = vunpack.c.l.b16 %v631
    %v930 = vunpack.c.h.b16 %v631
    %v931 = vunpack.c.l.b16 %v632
    %v932 = vunpack.c.h.b16 %v632
    %v933 = vunpack.c.l.b16 %v633
    %v934 = vunpack.c.h.b16 %v633
    %v935 = vunpack.c.l.b16 %v634
    %v936 = vunpack.c.h.b16 %v634
    %v937 = vunpack.c.l.b16 %v635
    %v938 = vunpack.c.h.b16 %v635
    %v939 = vunpack.c.l.b16 %v636
    %v940 = vunpack.c.h.b16 %v636
    %v941 = vunpack.c.l.b16 %v637
    %v942 = vunpack.c.h.b16 %v637
    %v943 = vunpack.c.l.b16 %v638
    %v944 = vunpack.c.h.b16 %v638
    %v945 = vunpack.c.l.b16 %v639
    %v946 = vunpack.c.h.b16 %v639
    %v947 = vunpack.c.l.b16 %v640
    %v948 = vunpack.c.h.b16 %v640
    %v949 = vunpack.c.l.b16 %v641
    %v950 = vunpack.c.h.b16 %v641
    %v951 = vunpack.c.l.b16 %v642
    %v952 = vunpack.c.h.b16 %v642
    %v953 = vunpack.c.l.b16 %v643
    %v954 = vunpack.c.h.b16 %v643
    %v955 = vunpack.c.l.b16 %v644
    %v956 = vunpack.c.h.b16 %v644
    %v957 = vunpack.c.l.b16 %v645
    %v958 = vunpack.c.h.b16 %v645
    %v959 = vunpack.c.l.b16 %v646
    %v960 = vunpack.c.h.b16 %v646
    %v961 = vunpack.c.l.b16 %v647
    %v962 = vunpack.c.h.b16 %v647
    %v963 = vunpack.c.l.b16 %v648
    %v964 = vunpack.c.h.b16 %v648
    %v965 = vunpack.c.l.b16 %v649
    %v966 = vunpack.c.h.b16 %v649
    %v967 = vunpack.c.l.b16 %v650
    %v968 = vunpack.c.h.b16 %v650
    %v969 = vunpack.c.l.b16 %v651
    %v970 = vunpack.c.h.b16 %v651
    %v971 = vunpack.c.l.b16 %v652
    %v972 = vunpack.c.h.b16 %v652
    %v973 = vunpack.c.l.b16 %v653
    %v974 = vunpack.c.h.b16 %v653
    %v975 = vunpack.c.l.b16 %v654
    %v976 = vunpack.c.h.b16 %v654
    %v977 = vunpack.c.l.b16 %v655
    %v978 = vunpack.c.h.b16 %v655
    %v979 = vunpack.c.l.b16 %v656
    %v980 = vunpack.c.h.b16 %v656
    %v981 = vunpack.c.l.b16 %v657
    %v982 = vunpack.c.h.b16 %v657
    %v983 = vunpack.c.l.b16 %v658
    %v984 = vunpack.c.h.b16 %v658
    %v985 = vunpack.c.l.b16 %v659
    %v986 = vunpack.c.h.b16 %v659
    %v987 = vunpack.c.l.b16 %v660
    %v988 = vunpack.c.h.b16 %v660
    %v989 = vunpack.c.l.b16 %v661
    %v990 = vunpack.c.h.b16 %v661
    %v991 = vunpack.c.l.b16 %v662
    %v992 = vunpack.c.h.b16 %v662
    %v993 = vunpack.c.l.b16 %v663
    %v994 = vunpack.c.h.b16 %v663
    %v995 = vunpack.c.l.b16 %v664
    %v996 = vunpack.c.h.b16 %v664
    %v997 = vunpack.c.l.b16 %v665
    %v998 = vunpack.c.h.b16 %v665
    %v999 = vunpack.c.l.b16 %v666
    %v1000 = vunpack.c.h.b16 %v666
    %v1001 = vunpack.c.l.b16 %v667
    %v1002 = vunpack.c.h.b16 %v667
    %v1003 = vunpack.c.l.b16 %v668
    %v1004 = vunpack.c.h.b16 %v668
    %v1005 = vunpack.c.l.b16 %v669
    %v1006 = vunpack.c.h.b16 %v669
    %v1007 = vunpack.c.l.b16 %v670
    %v1008 = vunpack.c.h.b16 %v670
    %v1009 = vunpack.c.l.b16 %v671
    %v1010 = vunpack.c.h.b16 %v671
    %v1011 = vunpack.c.l.b16 %v672
    %v1012 = vunpack.c.h.b16 %v672
    %v1013 = vunpack.c.l.b16 %v673
    %v1014 = vunpack.c.h.b16 %v673
    %v1015 = vunpack.c.l.b16 %v674
    %v1016 = vunpack.c.h.b16 %v674
    %v1017 = vunpack.c.l.b16 %v675
    %v1018 = vunpack.c.h.b16 %v675
    %v1019 = vunpack.c.l.b16 %v676
    %v1020 = vunpack.c.h.b16 %v676
    %v1021 = vunpack.c.l.b16 %v677
    %v1022 = vunpack.c.h.b16 %v677
    %v1023 = vunpack.c.l.b16 %v678
    %v1024 = vunpack.c.h.b16 %v678
    %v1025 = vunpack.c.l.b16 %v679
    %v1026 = vunpack.c.h.b16 %v679
    %v1027 = vunpack.c.l.b16 %v680
    %v1028 = vunpack.c.h.b16 %v680
    %v1029 = vunpack.c.l.b16 %v681
    %v1030 = vunpack.c.h.b16 %v681
    %v1031 = vunpack.c.l.b16 %v682
    %v1032 = vunpack.c.h.b16 %v682
    %v1033 = vunpack.c.l.b16 %v683
    %v1034 = vunpack.c.h.b16 %v683
    %v1035 = vunpack.c.l.b16 %v684
    %v1036 = vunpack.c.h.b16 %v684
    %v1037 = vunpack.c.l.b16 %v685
    %v1038 = vunpack.c.h.b16 %v685
    %v1039 = vunpack.c.l.b16 %v686
    %v1040 = vunpack.c.h.b16 %v686
    %v1041 = vunpack.c.l.b16 %v687
    %v1042 = vunpack.c.h.b16 %v687
    %v1043 = vunpack.c.l.b16 %v688
    %v1044 = vunpack.c.h.b16 %v688
    %v1045 = vunpack.c.l.b16 %v689
    %v1046 = vunpack.c.h.b16 %v689
    %v1047 = vunpack.c.l.b16 %v690
    %v1048 = vunpack.c.h.b16 %v690
    %v1049 = vunpack.c.l.b16 %v691
    %v1050 = vunpack.c.h.b16 %v691
    %v1051 = vunpack.c.l.b16 %v692
    %v1052 = vunpack.c.h.b16 %v692
    %v1053 = vunpack.c.l.b16 %v693
    %v1054 = vunpack.c.h.b16 %v693
    %v1055 = vunpack.c.l.b16 %v694
    %v1056 = vunpack.c.h.b16 %v694
    %v1057 = vunpack.c.l.b16 %v695
    %v1058 = vunpack.c.h.b16 %v695
    %v1059 = vunpack.c.l.b16 %v696
    %v1060 = vunpack.c.h.b16 %v696
    %v1061 = vunpack.c.l.b16 %v697
    %v1062 = vunpack.c.h.b16 %v697
    %v1063 = vunpack.c.l.b16 %v698
    %v1064 = vunpack.c.h.b16 %v698
    %v1065 = vunpack.c.l.b16 %v699
    %v1066 = vunpack.c.h.b16 %v699
    %v1067 = vunpack.c.l.b16 %v700
    %v1068 = vunpack.c.h.b16 %v700
    %v1069 = vunpack.c.l.b16 %v701
    %v1070 = vunpack.c.h.b16 %v701
    %v1071 = vunpack.c.l.b16 %v702
    %v1072 = vunpack.c.h.b16 %v702
    %v1073 = vunpack.c.l.b16 %v703
    %v1074 = vunpack.c.h.b16 %v703
    %v1075 = vunpack.c.l.b16 %v704
    %v1076 = vunpack.c.h.b16 %v704
    %v1077 = vunpack.c.l.b16 %v705
    %v1078 = vunpack.c.h.b16 %v705
    %v1079 = vunpack.c.l.b16 %v706
    %v1080 = vunpack.c.h.b16 %v706
    %v1081 = vunpack.c.l.b16 %v707
    %v1082 = vunpack.c.h.b16 %v707
    %v1083 = vunpack.c.l.b16 %v708
    %v1084 = vunpack.c.h.b16 %v708
    %v1085 = vunpack.c.l.b16 %v709
    %v1086 = vunpack.c.h.b16 %v709
    %v1087 = vunpack.c.l.b16 %v710
    %v1088 = vunpack.c.h.b16 %v710
    %v1089 = vunpack.c.l.b16 %v711
    %v1090 = vunpack.c.h.b16 %v711
    %v1091 = vunpack.c.l.b16 %v712
    %v1092 = vunpack.c.h.b16 %v712
    %v1093 = vunpack.c.l.b16 %v713
    %v1094 = vunpack.c.h.b16 %v713
    %v1095 = vunpack.c.l.b16 %v714
    %v1096 = vunpack.c.h.b16 %v714
    %v1097 = vunpack.c.l.b16 %v715
    %v1098 = vunpack.c.h.b16 %v715
    %v1099 = vunpack.c.l.b16 %v716
    %v1100 = vunpack.c.h.b16 %v716
    %v1101 = vunpack.c.l.b16 %v717
    %v1102 = vunpack.c.h.b16 %v717
    %v1103 = vunpack.c.l.b16 %v718
    %v1104 = vunpack.c.h.b16 %v718
    %v1105 = vunpack.c.l.b16 %v719
    %v1106 = vunpack.c.h.b16 %v719
    %v1107 = vunpack.c.l.b16 %v720
    %v1108 = vunpack.c.h.b16 %v720
    %v1109 = vunpack.c.l.b16 %v721
    %v1110 = vunpack.c.h.b16 %v721
    %v1111 = vunpack.c.l.b16 %v722
    %v1112 = vunpack.c.h.b16 %v722
    %v1113 = vunpack.c.l.b16 %v723
    %v1114 = vunpack.c.h.b16 %v723
    %v1115 = vunpack.c.l.b16 %v724
    %v1116 = vunpack.c.h.b16 %v724
    %v1117 = vunpack.c.l.b16 %v725
    %v1118 = vunpack.c.h.b16 %v725
    %v1119 = vunpack.c.l.b16 %v726
    %v1120 = vunpack.c.h.b16 %v726
    %v1121 = vunpack.c.l.b16 %v727
    %v1122 = vunpack.c.h.b16 %v727
    %v1123 = vunpack.c.l.b16 %v728
    %v1124 = vunpack.c.h.b16 %v728
    %v1125 = vunpack.c.l.b16 %v729
    %v1126 = vunpack.c.h.b16 %v729
    %v1127 = vunpack.c.l.b16 %v730
    %v1128 = vunpack.c.h.b16 %v730
    %v1129 = vunpack.c.l.b16 %v731
    %v1130 = vunpack.c.h.b16 %v731
    %v1131 = vunpack.c.l.b16 %v732
    %v1132 = vunpack.c.h.b16 %v732
    %v1133 = vunpack.c.l.b16 %v733
    %v1134 = vunpack.c.h.b16 %v733
    %v1135 = vunpack.c.l.b16 %v734
    %v1136 = vunpack.c.h.b16 %v734
    %v1137 = vunpack.c.l.b16 %v735
    %v1138 = vunpack.c.h.b16 %v735
    %v1139 = vunpack.c.l.b16 %v736
    %v1140 = vunpack.c.h.b16 %v736
    %v1141 = vunpack.c.l.b16 %v737
    %v1142 = vunpack.c.h.b16 %v737
    %v1143 = vunpack.c.l.b16 %v738
    %v1144 = vunpack.c.h.b16 %v738
    %v1145 = vpack.c.b16 %v893, %v889
    %v1146 = vpack.c.b16 %v894, %v890
    %v1147 = vpack.c.b16 %v895, %v891
    %v1148 = vpack.c.b16 %v896, %v892
    %v1149 = vpack.c.b16 %v901, %v897
    %v1150 = vpack.c.b16 %v902, %v898
    %v1151 = vpack.c.b16 %v903, %v899
    %v1152 = vpack.c.b16 %v904, %v900
    %v1153 = vpack.c.b16 %v909, %v905
    %v1154 = vpack.c.b16 %v910, %v906
    %v1155 = vpack.c.b16 %v911, %v907
    %v1156 = vpack.c.b16 %v912, %v908
    %v1157 = vpack.c.b16 %v917, %v913
    %v1158 = vpack.c.b16 %v918, %v914
    %v1159 = vpack.c.b16 %v919, %v915
    %v1160 = vpack.c.b16 %v920, %v916
    %v1161 = vpack.c.b16 %v925, %v921
    %v1162 = vpack.c.b16 %v926, %v922
    %v1163 = vpack.c.b16 %v927, %v923
    %v1164 = vpack.c.b16 %v928, %v924
    %v1165 = vpack.c.b16 %v933, %v929
    %v1166 = vpack.c.b16 %v934, %v930
    %v1167 = vpack.c.b16 %v935, %v931
    %v1168 = vpack.c.b16 %v936, %v932
    %v1169 = vpack.c.b16 %v941, %v937
    %v1170 = vpack.c.b16 %v942, %v938
    %v1171 = vpack.c.b16 %v943, %v939
    %v1172 = vpack.c.b16 %v944, %v940
    %v1173 = vpack.c.b16 %v949, %v945
    %v1174 = vpack.c.b16 %v950, %v946
    %v1175 = vpack.c.b16 %v951, %v947
    %v1176 = vpack.c.b16 %v952, %v948
    %v1177 = vpack.c.b16 %v957, %v953
    %v1178 = vpack.c.b16 %v958, %v954
    %v1179 = vpack.c.b16 %v959, %v955
    %v1180 = vpack.c.b16 %v960, %v956
    %v1181 = vpack.c.b16 %v965, %v961
    %v1182 = vpack.c.b16 %v966, %v962
    %v1183 = vpack.c.b16 %v967, %v963
    %v1184 = vpack.c.b16 %v968, %v964
    %v1185 = vpack.c.b16 %v973, %v969
    %v1186 = vpack.c.b16 %v974, %v970
    %v1187 = vpack.c.b16 %v975, %v971
    %v1188 = vpack.c.b16 %v976, %v972
    %v1189 = vpack.c.b16 %v981, %v977
    %v1190 = vpack.c.b16 %v982, %v978
    %v1191 = vpack.c.b16 %v983, %v979
    %v1192 = vpack.c.b16 %v984, %v980
    %v1193 = vpack.c.b16 %v989, %v985
    %v1194 = vpack.c.b16 %v990, %v986
    %v1195 = vpack.c.b16 %v991, %v987
    %v1196 = vpack.c.b16 %v992, %v988
    %v1197 = vpack.c.b16 %v997, %v993
    %v1198 = vpack.c.b16 %v998, %v994
    %v1199 = vpack.c.b16 %v999, %v995
    %v1200 = vpack.c.b16 %v1000, %v996
    %v1201 = vpack.c.b16 %v1005, %v1001
    %v1202 = vpack.c.b16 %v1006, %v1002
    %v1203 = vpack.c.b16 %v1007, %v1003
    %v1204 = vpack.c.b16 %v1008, %v1004
    %v1205 = vpack.c.b16 %v1013, %v1009
    %v1206 = vpack.c.b16 %v1014, %v1010
    %v1207 = vpack.c.b16 %v1015, %v1011
    %v1208 = vpack.c.b16 %v1016, %v1012
    %v1209 = vpack.c.b16 %v1021, %v1017
    %v1210 = vpack.c.b16 %v1022, %v1018
    %v1211 = vpack.c.b16 %v1023, %v1019
    %v1212 = vpack.c.b16 %v1024, %v1020
    %v1213 = vpack.c.b16 %v1029, %v1025
    %v1214 = vpack.c.b16 %v1030, %v1026
    %v1215 = vpack.c.b16 %v1031, %v1027
    %v1216 = vpack.c.b16 %v1032, %v1028
    %v1217 = vpack.c.b16 %v1037, %v1033
    %v1218 = vpack.c.b16 %v1038, %v1034
    %v1219 = vpack.c.b16 %v1039, %v1035
    %v1220 = vpack.c.b16 %v1040, %v1036
    %v1221 = vpack.c.b16 %v1045, %v1041
    %v1222 = vpack.c.b16 %v1046, %v1042
    %v1223 = vpack.c.b16 %v1047, %v1043
    %v1224 = vpack.c.b16 %v1048, %v1044
    %v1225 = vpack.c.b16 %v1053, %v1049
    %v1226 = vpack.c.b16 %v1054, %v1050
    %v1227 = vpack.c.b16 %v1055, %v1051
    %v1228 = vpack.c.b16 %v1056, %v1052
    %v1229 = vpack.c.b16 %v1061, %v1057
    %v1230 = vpack.c.b16 %v1062, %v1058
    %v1231 = vpack.c.b16 %v1063, %v1059
    %v1232 = vpack.c.b16 %v1064, %v1060
    %v1233 = vpack.c.b16 %v1069, %v1065
    %v1234 = vpack.c.b16 %v1070, %v1066
    %v1235 = vpack.c.b16 %v1071, %v1067
    %v1236 = vpack.c.b16 %v1072, %v1068
    %v1237 = vpack.c.b16 %v1077, %v1073
    %v1238 = vpack.c.b16 %v1078, %v1074
    %v1239 = vpack.c.b16 %v1079, %v1075
    %v1240 = vpack.c.b16 %v1080, %v1076
    %v1241 = vpack.c.b16 %v1085, %v1081
    %v1242 = vpack.c.b16 %v1086, %v1082
    %v1243 = vpack.c.b16 %v1087, %v1083
    %v1244 = vpack.c.b16 %v1088, %v1084
    %v1245 = vpack.c.b16 %v1093, %v1089
    %v1246 = vpack.c.b16 %v1094, %v1090
    %v1247 = vpack.c.b16 %v1095, %v1091
    %v1248 = vpack.c.b16 %v1096, %v1092
    %v1249 = vpack.c.b16 %v1101, %v1097
    %v1250 = vpack.c.b16 %v1102, %v1098
    %v1251 = vpack.c.b16 %v1103, %v1099
    %v1252 = vpack.c.b16 %v1104, %v1100
    %v1253 = vpack.c.b16 %v1109, %v1105
    %v1254 = vpack.c.b16 %v1110, %v1106
    %v1255 = vpack.c.b16 %v1111, %v1107
    %v1256 = vpack.c.b16 %v1112, %v1108
    %v1257 = vpack.c.b16 %v1117, %v1113
    %v1258 = vpack.c.b16 %v1118, %v1114
    %v1259 = vpack.c.b16 %v1119, %v1115
    %v1260 = vpack.c.b16 %v1120, %v1116
    %v1261 = vpack.c.b16 %v1125, %v1121
    %v1262 = vpack.c.b16 %v1126, %v1122
    %v1263 = vpack.c.b16 %v1127, %v1123
    %v1264 = vpack.c.b16 %v1128, %v1124
    %v1265 = vpack.c.b16 %v1133, %v1129
    %v1266 = vpack.c.b16 %v1134, %v1130
    %v1267 = vpack.c.b16 %v1135, %v1131
    %v1268 = vpack.c.b16 %v1136, %v1132
    %v1269 = vpack.c.b16 %v1141, %v1137
    %v1270 = vpack.c.b16 %v1142, %v1138
    %v1271 = vpack.c.b16 %v1143, %v1139
    %v1272 = vpack.c.b16 %v1144, %v1140
    %1401 = vmatprep.subr.bf16.mxu0 %v1146
    %1402 = vmatpush1.bf16.msra.mxu0 %v1145
    %1403 = vmatprep.subr.bf16.mxu0 %v1150
    %1404 = vmatpush1.bf16.msra.mxu0 %v1149
    %1405 = vmatprep.subr.bf16.mxu0 %v1154
    %1406 = vmatpush1.bf16.msra.mxu0 %v1153
    %1407 = vmatprep.subr.bf16.mxu0 %v1158
    %1408 = vmatpush1.bf16.msra.mxu0 %v1157
    %1409 = vmatprep.subr.bf16.mxu0 %v1162
    %1410 = vmatpush1.bf16.msra.mxu0 %v1161
    %1411 = vmatprep.subr.bf16.mxu0 %v1166
    %1412 = vmatpush1.bf16.msra.mxu0 %v1165
    %1413 = vmatprep.subr.bf16.mxu0 %v1170
    %1414 = vmatpush1.bf16.msra.mxu0 %v1169
    %1415 = vmatprep.subr.bf16.mxu0 %v1174
    %1416 = vmatpush1.bf16.msra.mxu0 %v1173
    %1417 = vmatprep.subr.bf16.mxu0 %v1178
    %1418 = vmatpush1.bf16.msra.mxu0 %v1177
    %1419 = vmatprep.subr.bf16.mxu0 %v1182
    %1420 = vmatpush1.bf16.msra.mxu0 %v1181
    %1421 = vmatprep.subr.bf16.mxu0 %v1186
    %1422 = vmatpush1.bf16.msra.mxu0 %v1185
    %1423 = vmatprep.subr.bf16.mxu0 %v1190
    %1424 = vmatpush1.bf16.msra.mxu0 %v1189
    %1425 = vmatprep.subr.bf16.mxu0 %v1194
    %1426 = vmatpush1.bf16.msra.mxu0 %v1193
    %1427 = vmatprep.subr.bf16.mxu0 %v1198
    %1428 = vmatpush1.bf16.msra.mxu0 %v1197
    %1429 = vmatprep.subr.bf16.mxu0 %v1202
    %1430 = vmatpush1.bf16.msra.mxu0 %v1201
    %1431 = vmatprep.subr.bf16.mxu0 %v1206
    %1432 = vmatpush1.bf16.msra.mxu0 %v1205
    %1433 = vmatprep.mubr.bf16.mxu0 %v608
    %1434 = vmatmul.mubr.bf16.gmra.mrb[0].mxu0 %v607
    %v1435 = vpop.f32.mrb[0].mxu0
    %v1436 = vadd.f32 %v744, %v1435
    %v1437 = vpop.f32.mrb[0].mxu0
    %v1438 = vadd.f32 %v748, %v1437
    %v1439 = vpop.f32.mrb[0].mxu0
    %v1440 = vadd.f32 %v744, %v1439
    %v1441 = vpop.f32.mrb[0].mxu0
    %v1442 = vadd.f32 %v748, %v1441
    %1443 = vdwg.mxu0
    %1444 = vmatprep.subr.bf16.mxu0 %v1210
    %1445 = vmatpush1.bf16.msra.mxu0 %v1209
    %1446 = vmatprep.subr.bf16.mxu0 %v1214
    %1447 = vmatpush1.bf16.msra.mxu0 %v1213
    %1448 = vmatprep.subr.bf16.mxu0 %v1218
    %1449 = vmatpush1.bf16.msra.mxu0 %v1217
    %1450 = vmatprep.subr.bf16.mxu0 %v1222
    %1451 = vmatpush1.bf16.msra.mxu0 %v1221
    %1452 = vmatprep.subr.bf16.mxu0 %v1226
    %1453 = vmatpush1.bf16.msra.mxu0 %v1225
    %1454 = vmatprep.subr.bf16.mxu0 %v1230
    %1455 = vmatpush1.bf16.msra.mxu0 %v1229
    %1456 = vmatprep.subr.bf16.mxu0 %v1234
    %1457 = vmatpush1.bf16.msra.mxu0 %v1233
    %1458 = vmatprep.subr.bf16.mxu0 %v1238
    %1459 = vmatpush1.bf16.msra.mxu0 %v1237
    %1460 = vmatprep.subr.bf16.mxu0 %v1242
    %1461 = vmatpush1.bf16.msra.mxu0 %v1241
    %1462 = vmatprep.subr.bf16.mxu0 %v1246
    %1463 = vmatpush1.bf16.msra.mxu0 %v1245
    %1464 = vmatprep.subr.bf16.mxu0 %v1250
    %1465 = vmatpush1.bf16.msra.mxu0 %v1249
    %1466 = vmatprep.subr.bf16.mxu0 %v1254
    %1467 = vmatpush1.bf16.msra.mxu0 %v1253
    %1468 = vmatprep.subr.bf16.mxu0 %v1258
    %1469 = vmatpush1.bf16.msra.mxu0 %v1257
    %1470 = vmatprep.subr.bf16.mxu0 %v1262
    %1471 = vmatpush1.bf16.msra.mxu0 %v1261
    %1472 = vmatprep.subr.bf16.mxu0 %v1266
    %1473 = vmatpush1.bf16.msra.mxu0 %v1265
    %1474 = vmatprep.subr.bf16.mxu0 %v1270
    %1475 = vmatpush1.bf16.msra.mxu0 %v1269
    %1476 = vmatprep.mubr.bf16.mxu0 %v610
    %1477 = vmatmul.mubr.bf16.gmra.mrb[0].mxu0 %v609
    %v1478 = vpop.f32.mrb[0].mxu0
    %v1479 = vadd.f32 %v1436, %v1478
    %v1480 = vpop.f32.mrb[0].mxu0
    %v1481 = vadd.f32 %v1438, %v1480
    %v1482 = vpop.f32.mrb[0].mxu0
    %v1483 = vadd.f32 %v1440, %v1482
    %v1484 = vpop.f32.mrb[0].mxu0
    %v1485 = vadd.f32 %v1442, %v1484
    %1486 = vdwg.mxu0
    %1487 = vmatprep.subr.bf16.mxu0 %v1148
    %1488 = vmatpush1.bf16.msra.mxu0 %v1147
    %1489 = vmatprep.subr.bf16.mxu0 %v1152
    %1490 = vmatpush1.bf16.msra.mxu0 %v1151
    %1491 = vmatprep.subr.bf16.mxu0 %v1156
    %1492 = vmatpush1.bf16.msra.mxu0 %v1155
    %1493 = vmatprep.subr.bf16.mxu0 %v1160
    %1494 = vmatpush1.bf16.msra.mxu0 %v1159
    %1495 = vmatprep.subr.bf16.mxu0 %v1164
    %1496 = vmatpush1.bf16.msra.mxu0 %v1163
    %1497 = vmatprep.subr.bf16.mxu0 %v1168
    %1498 = vmatpush1.bf16.msra.mxu0 %v1167
    %1499 = vmatprep.subr.bf16.mxu0 %v1172
    %1500 = vmatpush1.bf16.msra.mxu0 %v1171
    %1501 = vmatprep.subr.bf16.mxu0 %v1176
    %1502 = vmatpush1.bf16.msra.mxu0 %v1175
    %1503 = vmatprep.subr.bf16.mxu0 %v1180
    %1504 = vmatpush1.bf16.msra.mxu0 %v1179
    %1505 = vmatprep.subr.bf16.mxu0 %v1184
    %1506 = vmatpush1.bf16.msra.mxu0 %v1183
    %1507 = vmatprep.subr.bf16.mxu0 %v1188
    %1508 = vmatpush1.bf16.msra.mxu0 %v1187
    %1509 = vmatprep.subr.bf16.mxu0 %v1192
    %1510 = vmatpush1.bf16.msra.mxu0 %v1191
    %1511 = vmatprep.subr.bf16.mxu0 %v1196
    %1512 = vmatpush1.bf16.msra.mxu0 %v1195
    %1513 = vmatprep.subr.bf16.mxu0 %v1200
    %1514 = vmatpush1.bf16.msra.mxu0 %v1199
    %1515 = vmatprep.subr.bf16.mxu0 %v1204
    %1516 = vmatpush1.bf16.msra.mxu0 %v1203
    %1517 = vmatprep.subr.bf16.mxu0 %v1208
    %1518 = vmatpush1.bf16.msra.mxu0 %v1207
    %1519 = vmatprep.mubr.bf16.mxu0 %v608
    %1520 = vmatmul.mubr.bf16.gmra.mrb[0].mxu0 %v607
    %v1521 = vpop.f32.mrb[0].mxu0
    %v1522 = vadd.f32 %v752, %v1521
    %v1523 = vpop.f32.mrb[0].mxu0
    %v1524 = vadd.f32 %v756, %v1523
    %v1525 = vpop.f32.mrb[0].mxu0
    %v1526 = vadd.f32 %v752, %v1525
    %v1527 = vpop.f32.mrb[0].mxu0
    %v1528 = vadd.f32 %v756, %v1527
    %1529 = vdwg.mxu0
    %1530 = vmatprep.subr.bf16.mxu0 %v1212
    %1531 = vmatpush1.bf16.msra.mxu0 %v1211
    %1532 = vmatprep.subr.bf16.mxu0 %v1216
    %1533 = vmatpush1.bf16.msra.mxu0 %v1215
    %1534 = vmatprep.subr.bf16.mxu0 %v1220
    %1535 = vmatpush1.bf16.msra.mxu0 %v1219
    %1536 = vmatprep.subr.bf16.mxu0 %v1224
    %1537 = vmatpush1.bf16.msra.mxu0 %v1223
    %1538 = vmatprep.subr.bf16.mxu0 %v1228
    %1539 = vmatpush1.bf16.msra.mxu0 %v1227
    %1540 = vmatprep.subr.bf16.mxu0 %v1232
    %1541 = vmatpush1.bf16.msra.mxu0 %v1231
    %1542 = vmatprep.subr.bf16.mxu0 %v1236
    %1543 = vmatpush1.bf16.msra.mxu0 %v1235
    %1544 = vmatprep.subr.bf16.mxu0 %v1240
    %1545 = vmatpush1.bf16.msra.mxu0 %v1239
    %1546 = vmatprep.subr.bf16.mxu0 %v1244
    %1547 = vmatpush1.bf16.msra.mxu0 %v1243
    %1548 = vmatprep.subr.bf16.mxu0 %v1248
    %1549 = vmatpush1.bf16.msra.mxu0 %v1247
    %1550 = vmatprep.subr.bf16.mxu0 %v1252
    %1551 = vmatpush1.bf16.msra.mxu0 %v1251
    %1552 = vmatprep.subr.bf16.mxu0 %v1256
    %1553 = vmatpush1.bf16.msra.mxu0 %v1255
    %1554 = vmatprep.subr.bf16.mxu0 %v1260
    %1555 = vmatpush1.bf16.msra.mxu0 %v1259
    %1556 = vmatprep.subr.bf16.mxu0 %v1264
    %1557 = vmatpush1.bf16.msra.mxu0 %v1263
    %1558 = vmatprep.subr.bf16.mxu0 %v1268
    %1559 = vmatpush1.bf16.msra.mxu0 %v1267
    %1560 = vmatprep.subr.bf16.mxu0 %v1272
    %1561 = vmatpush1.bf16.msra.mxu0 %v1271
    %1562 = vmatprep.mubr.bf16.mxu0 %v610
    %1563 = vmatmul.mubr.bf16.gmra.mrb[0].mxu0 %v609
    %v1564 = vpop.f32.mrb[0].mxu0
    %v1565 = vadd.f32 %v1522, %v1564
    %v1566 = vpop.f32.mrb[0].mxu0
    %v1567 = vadd.f32 %v1524, %v1566
    %v1568 = vpop.f32.mrb[0].mxu0
    %v1569 = vadd.f32 %v1526, %v1568
    %v1570 = vpop.f32.mrb[0].mxu0
    %v1571 = vadd.f32 %v1528, %v1570
    %1572 = vdwg.mxu0
    %v1573 = vmax.f32 %v1479, 0.0
    %v1574 = vmax.f32 %v1481, 0.0
    %v1575 = vmax.f32 %v1565, 0.0
    %v1576 = vmax.f32 %v1567, 0.0
    %v1577 = vmax.f32 %v1483, 0.0
    %v1578 = vmax.f32 %v1485, 0.0
    %v1579 = vmax.f32 %v1569, 0.0
    %v1580 = vmax.f32 %v1571, 0.0
    %v1581 = vpack.c.bf16 %v1577, %v1573
    %v1582 = vpack.c.bf16 %v1578, %v1574
    %v1583 = vpack.c.bf16 %v1579, %v1575
    %v1584 = vpack.c.bf16 %v1580, %v1576
    %v1585 = vld [vmem:[#allocation8] sm:$0xff]
    %v1586 = vld [vmem:[#allocation8 + $0x8] sm:$0xff]
    %v1587 = vld [vmem:[#allocation8 + $0x10] sm:$0xff]
    %v1588 = vld [vmem:[#allocation8 + $0x18] sm:$0xff]
    %v1589 = vld [vmem:[#allocation8 + $0x20] sm:$0xff]
    %v1590 = vld [vmem:[#allocation8 + $0x28] sm:$0xff]
    %v1591 = vld [vmem:[#allocation8 + $0x30] sm:$0xff]
    %v1592 = vld [vmem:[#allocation8 + $0x38] sm:$0xff]
    %v1593 = vld [vmem:[#allocation8 + $0x40] sm:$0xff]
    %v1594 = vld [vmem:[#allocation8 + $0x48] sm:$0xff]
    %v1595 = vld [vmem:[#allocation8 + $0x50] sm:$0xff]
    %v1596 = vld [vmem:[#allocation8 + $0x58] sm:$0xff]
    %v1597 = vld [vmem:[#allocation8 + $0x60] sm:$0xff]
    %v1598 = vld [vmem:[#allocation8 + $0x68] sm:$0xff]
    %v1599 = vld [vmem:[#allocation8 + $0x70] sm:$0xff]
    %v1600 = vld [vmem:[#allocation8 + $0x78] sm:$0xff]
    %v1601 = vld [vmem:[#allocation8 + $0x80] sm:$0xff]
    %v1602 = vld [vmem:[#allocation8 + $0x88] sm:$0xff]
    %v1603 = vld [vmem:[#allocation8 + $0x90] sm:$0xff]
    %v1604 = vld [vmem:[#allocation8 + $0x98] sm:$0xff]
    %v1605 = vld [vmem:[#allocation8 + $0xa0] sm:$0xff]
    %v1606 = vld [vmem:[#allocation8 + $0xa8] sm:$0xff]
    %v1607 = vld [vmem:[#allocation8 + $0xb0] sm:$0xff]
    %v1608 = vld [vmem:[#allocation8 + $0xb8] sm:$0xff]
    %v1609 = vld [vmem:[#allocation8 + $0xc0] sm:$0xff]
    %v1610 = vld [vmem:[#allocation8 + $0xc8] sm:$0xff]
    %v1611 = vld [vmem:[#allocation8 + $0xd0] sm:$0xff]
    %v1612 = vld [vmem:[#allocation8 + $0xd8] sm:$0xff]
    %v1613 = vld [vmem:[#allocation8 + $0xe0] sm:$0xff]
    %v1614 = vld [vmem:[#allocation8 + $0xe8] sm:$0xff]
    %v1615 = vld [vmem:[#allocation8 + $0xf0] sm:$0xff]
    %v1616 = vld [vmem:[#allocation8 + $0xf8] sm:$0xff]
    %v1617 = vld [vmem:[#allocation8 + $0x100] sm:$0xff]
    %v1618 = vld [vmem:[#allocation8 + $0x108] sm:$0xff]
    %v1619 = vld [vmem:[#allocation8 + $0x110] sm:$0xff]
    %v1620 = vld [vmem:[#allocation8 + $0x118] sm:$0xff]
    %v1621 = vld [vmem:[#allocation8 + $0x120] sm:$0xff]
    %v1622 = vld [vmem:[#allocation8 + $0x128] sm:$0xff]
    %v1623 = vld [vmem:[#allocation8 + $0x130] sm:$0xff]
    %v1624 = vld [vmem:[#allocation8 + $0x138] sm:$0xff]
    %v1625 = vld [vmem:[#allocation8 + $0x140] sm:$0xff]
    %v1626 = vld [vmem:[#allocation8 + $0x148] sm:$0xff]
    %v1627 = vld [vmem:[#allocation8 + $0x150] sm:$0xff]
    %v1628 = vld [vmem:[#allocation8 + $0x158] sm:$0xff]
    %v1629 = vld [vmem:[#allocation8 + $0x160] sm:$0xff]
    %v1630 = vld [vmem:[#allocation8 + $0x168] sm:$0xff]
    %v1631 = vld [vmem:[#allocation8 + $0x170] sm:$0xff]
    %v1632 = vld [vmem:[#allocation8 + $0x178] sm:$0xff]
    %v1633 = vld [vmem:[#allocation8 + $0x180] sm:$0xff]
    %v1634 = vld [vmem:[#allocation8 + $0x188] sm:$0xff]
    %v1635 = vld [vmem:[#allocation8 + $0x190] sm:$0xff]
    %v1636 = vld [vmem:[#allocation8 + $0x198] sm:$0xff]
    %v1637 = vld [vmem:[#allocation8 + $0x1a0] sm:$0xff]
    %v1638 = vld [vmem:[#allocation8 + $0x1a8] sm:$0xff]
    %v1639 = vld [vmem:[#allocation8 + $0x1b0] sm:$0xff]
    %v1640 = vld [vmem:[#allocation8 + $0x1b8] sm:$0xff]
    %v1641 = vld [vmem:[#allocation8 + $0x1c0] sm:$0xff]
    %v1642 = vld [vmem:[#allocation8 + $0x1c8] sm:$0xff]
    %v1643 = vld [vmem:[#allocation8 + $0x1d0] sm:$0xff]
    %v1644 = vld [vmem:[#allocation8 + $0x1d8] sm:$0xff]
    %v1645 = vld [vmem:[#allocation8 + $0x1e0] sm:$0xff]
    %v1646 = vld [vmem:[#allocation8 + $0x1e8] sm:$0xff]
    %v1647 = vld [vmem:[#allocation8 + $0x1f0] sm:$0xff]
    %v1648 = vld [vmem:[#allocation8 + $0x1f8] sm:$0xff]
    %v1649 = vld [vmem:[#allocation8 + $0x200] sm:$0xff]
    %v1650 = vld [vmem:[#allocation8 + $0x208] sm:$0xff]
    %v1651 = vld [vmem:[#allocation8 + $0x210] sm:$0xff]
    %v1652 = vld [vmem:[#allocation8 + $0x218] sm:$0xff]
    %v1653 = vld [vmem:[#allocation8 + $0x220] sm:$0xff]
    %v1654 = vld [vmem:[#allocation8 + $0x228] sm:$0xff]
    %v1655 = vld [vmem:[#allocation8 + $0x230] sm:$0xff]
    %v1656 = vld [vmem:[#allocation8 + $0x238] sm:$0xff]
    %v1657 = vld [vmem:[#allocation8 + $0x240] sm:$0xff]
    %v1658 = vld [vmem:[#allocation8 + $0x248] sm:$0xff]
    %v1659 = vld [vmem:[#allocation8 + $0x250] sm:$0xff]
    %v1660 = vld [vmem:[#allocation8 + $0x258] sm:$0xff]
    %v1661 = vld [vmem:[#allocation8 + $0x260] sm:$0xff]
    %v1662 = vld [vmem:[#allocation8 + $0x268] sm:$0xff]
    %v1663 = vld [vmem:[#allocation8 + $0x270] sm:$0xff]
    %v1664 = vld [vmem:[#allocation8 + $0x278] sm:$0xff]
    %v1665 = vld [vmem:[#allocation8 + $0x280] sm:$0xff]
    %v1666 = vld [vmem:[#allocation8 + $0x288] sm:$0xff]
    %v1667 = vld [vmem:[#allocation8 + $0x290] sm:$0xff]
    %v1668 = vld [vmem:[#allocation8 + $0x298] sm:$0xff]
    %v1669 = vld [vmem:[#allocation8 + $0x2a0] sm:$0xff]
    %v1670 = vld [vmem:[#allocation8 + $0x2a8] sm:$0xff]
    %v1671 = vld [vmem:[#allocation8 + $0x2b0] sm:$0xff]
    %v1672 = vld [vmem:[#allocation8 + $0x2b8] sm:$0xff]
    %v1673 = vld [vmem:[#allocation8 + $0x2c0] sm:$0xff]
    %v1674 = vld [vmem:[#allocation8 + $0x2c8] sm:$0xff]
    %v1675 = vld [vmem:[#allocation8 + $0x2d0] sm:$0xff]
    %v1676 = vld [vmem:[#allocation8 + $0x2d8] sm:$0xff]
    %v1677 = vld [vmem:[#allocation8 + $0x2e0] sm:$0xff]
    %v1678 = vld [vmem:[#allocation8 + $0x2e8] sm:$0xff]
    %v1679 = vld [vmem:[#allocation8 + $0x2f0] sm:$0xff]
    %v1680 = vld [vmem:[#allocation8 + $0x2f8] sm:$0xff]
    %v1681 = vld [vmem:[#allocation8 + $0x300] sm:$0xff]
    %v1682 = vld [vmem:[#allocation8 + $0x308] sm:$0xff]
    %v1683 = vld [vmem:[#allocation8 + $0x310] sm:$0xff]
    %v1684 = vld [vmem:[#allocation8 + $0x318] sm:$0xff]
    %v1685 = vld [vmem:[#allocation8 + $0x320] sm:$0xff]
    %v1686 = vld [vmem:[#allocation8 + $0x328] sm:$0xff]
    %v1687 = vld [vmem:[#allocation8 + $0x330] sm:$0xff]
    %v1688 = vld [vmem:[#allocation8 + $0x338] sm:$0xff]
    %v1689 = vld [vmem:[#allocation8 + $0x340] sm:$0xff]
    %v1690 = vld [vmem:[#allocation8 + $0x348] sm:$0xff]
    %v1691 = vld [vmem:[#allocation8 + $0x350] sm:$0xff]
    %v1692 = vld [vmem:[#allocation8 + $0x358] sm:$0xff]
    %v1693 = vld [vmem:[#allocation8 + $0x360] sm:$0xff]
    %v1694 = vld [vmem:[#allocation8 + $0x368] sm:$0xff]
    %v1695 = vld [vmem:[#allocation8 + $0x370] sm:$0xff]
    %v1696 = vld [vmem:[#allocation8 + $0x378] sm:$0xff]
    %v1697 = vld [vmem:[#allocation8 + $0x380] sm:$0xff]
    %v1698 = vld [vmem:[#allocation8 + $0x388] sm:$0xff]
    %v1699 = vld [vmem:[#allocation8 + $0x390] sm:$0xff]
    %v1700 = vld [vmem:[#allocation8 + $0x398] sm:$0xff]
    %v1701 = vld [vmem:[#allocation8 + $0x3a0] sm:$0xff]
    %v1702 = vld [vmem:[#allocation8 + $0x3a8] sm:$0xff]
    %v1703 = vld [vmem:[#allocation8 + $0x3b0] sm:$0xff]
    %v1704 = vld [vmem:[#allocation8 + $0x3b8] sm:$0xff]
    %v1705 = vld [vmem:[#allocation8 + $0x3c0] sm:$0xff]
    %v1706 = vld [vmem:[#allocation8 + $0x3c8] sm:$0xff]
    %v1707 = vld [vmem:[#allocation8 + $0x3d0] sm:$0xff]
    %v1708 = vld [vmem:[#allocation8 + $0x3d8] sm:$0xff]
    %v1709 = vld [vmem:[#allocation8 + $0x3e0] sm:$0xff]
    %v1710 = vld [vmem:[#allocation8 + $0x3e8] sm:$0xff]
    %v1711 = vld [vmem:[#allocation8 + $0x3f0] sm:$0xff]
    %v1712 = vld [vmem:[#allocation8 + $0x3f8] sm:$0xff]
    %v1713 = vld [vmem:[%s6] sm:$0xf]
    %v1715 = vlaneseq
    %v1716 = vshrl.u32 %v1715, 7
    %v1717 = vsub.s32 0, %v1716
    %v1718 = vrot.slane %v1713, %v1717
    %v1719 = vlaneseq
    %v1720 = vshrl.u32 %v1719, 7
    %v1721 = vsub.s32 1, %v1720
    %v1722 = vrot.slane %v1713, %v1721
    %v1723 = vlaneseq
    %v1724 = vshrl.u32 %v1723, 7
    %v1725 = vsub.s32 2, %v1724
    %v1726 = vrot.slane %v1713, %v1725
    %v1727 = vlaneseq
    %v1728 = vshrl.u32 %v1727, 7
    %v1729 = vsub.s32 3, %v1728
    %v1730 = vrot.slane %v1713, %v1729
    %v1863 = vunpack.c.l.b16 %v1585
    %v1864 = vunpack.c.h.b16 %v1585
    %v1865 = vunpack.c.l.b16 %v1586
    %v1866 = vunpack.c.h.b16 %v1586
    %v1867 = vunpack.c.l.b16 %v1587
    %v1868 = vunpack.c.h.b16 %v1587
    %v1869 = vunpack.c.l.b16 %v1588
    %v1870 = vunpack.c.h.b16 %v1588
    %v1871 = vunpack.c.l.b16 %v1589
    %v1872 = vunpack.c.h.b16 %v1589
    %v1873 = vunpack.c.l.b16 %v1590
    %v1874 = vunpack.c.h.b16 %v1590
    %v1875 = vunpack.c.l.b16 %v1591
    %v1876 = vunpack.c.h.b16 %v1591
    %v1877 = vunpack.c.l.b16 %v1592
    %v1878 = vunpack.c.h.b16 %v1592
    %v1879 = vunpack.c.l.b16 %v1593
    %v1880 = vunpack.c.h.b16 %v1593
    %v1881 = vunpack.c.l.b16 %v1594
    %v1882 = vunpack.c.h.b16 %v1594
    %v1883 = vunpack.c.l.b16 %v1595
    %v1884 = vunpack.c.h.b16 %v1595
    %v1885 = vunpack.c.l.b16 %v1596
    %v1886 = vunpack.c.h.b16 %v1596
    %v1887 = vunpack.c.l.b16 %v1597
    %v1888 = vunpack.c.h.b16 %v1597
    %v1889 = vunpack.c.l.b16 %v1598
    %v1890 = vunpack.c.h.b16 %v1598
    %v1891 = vunpack.c.l.b16 %v1599
    %v1892 = vunpack.c.h.b16 %v1599
    %v1893 = vunpack.c.l.b16 %v1600
    %v1894 = vunpack.c.h.b16 %v1600
    %v1895 = vunpack.c.l.b16 %v1601
    %v1896 = vunpack.c.h.b16 %v1601
    %v1897 = vunpack.c.l.b16 %v1602
    %v1898 = vunpack.c.h.b16 %v1602
    %v1899 = vunpack.c.l.b16 %v1603
    %v1900 = vunpack.c.h.b16 %v1603
    %v1901 = vunpack.c.l.b16 %v1604
    %v1902 = vunpack.c.h.b16 %v1604
    %v1903 = vunpack.c.l.b16 %v1605
    %v1904 = vunpack.c.h.b16 %v1605
    %v1905 = vunpack.c.l.b16 %v1606
    %v1906 = vunpack.c.h.b16 %v1606
    %v1907 = vunpack.c.l.b16 %v1607
    %v1908 = vunpack.c.h.b16 %v1607
    %v1909 = vunpack.c.l.b16 %v1608
    %v1910 = vunpack.c.h.b16 %v1608
    %v1911 = vunpack.c.l.b16 %v1609
    %v1912 = vunpack.c.h.b16 %v1609
    %v1913 = vunpack.c.l.b16 %v1610
    %v1914 = vunpack.c.h.b16 %v1610
    %v1915 = vunpack.c.l.b16 %v1611
    %v1916 = vunpack.c.h.b16 %v1611
    %v1917 = vunpack.c.l.b16 %v1612
    %v1918 = vunpack.c.h.b16 %v1612
    %v1919 = vunpack.c.l.b16 %v1613
    %v1920 = vunpack.c.h.b16 %v1613
    %v1921 = vunpack.c.l.b16 %v1614
    %v1922 = vunpack.c.h.b16 %v1614
    %v1923 = vunpack.c.l.b16 %v1615
    %v1924 = vunpack.c.h.b16 %v1615
    %v1925 = vunpack.c.l.b16 %v1616
    %v1926 = vunpack.c.h.b16 %v1616
    %v1927 = vunpack.c.l.b16 %v1617
    %v1928 = vunpack.c.h.b16 %v1617
    %v1929 = vunpack.c.l.b16 %v1618
    %v1930 = vunpack.c.h.b16 %v1618
    %v1931 = vunpack.c.l.b16 %v1619
    %v1932 = vunpack.c.h.b16 %v1619
    %v1933 = vunpack.c.l.b16 %v1620
    %v1934 = vunpack.c.h.b16 %v1620
    %v1935 = vunpack.c.l.b16 %v1621
    %v1936 = vunpack.c.h.b16 %v1621
    %v1937 = vunpack.c.l.b16 %v1622
    %v1938 = vunpack.c.h.b16 %v1622
    %v1939 = vunpack.c.l.b16 %v1623
    %v1940 = vunpack.c.h.b16 %v1623
    %v1941 = vunpack.c.l.b16 %v1624
    %v1942 = vunpack.c.h.b16 %v1624
    %v1943 = vunpack.c.l.b16 %v1625
    %v1944 = vunpack.c.h.b16 %v1625
    %v1945 = vunpack.c.l.b16 %v1626
    %v1946 = vunpack.c.h.b16 %v1626
    %v1947 = vunpack.c.l.b16 %v1627
    %v1948 = vunpack.c.h.b16 %v1627
    %v1949 = vunpack.c.l.b16 %v1628
    %v1950 = vunpack.c.h.b16 %v1628
    %v1951 = vunpack.c.l.b16 %v1629
    %v1952 = vunpack.c.h.b16 %v1629
    %v1953 = vunpack.c.l.b16 %v1630
    %v1954 = vunpack.c.h.b16 %v1630
    %v1955 = vunpack.c.l.b16 %v1631
    %v1956 = vunpack.c.h.b16 %v1631
    %v1957 = vunpack.c.l.b16 %v1632
    %v1958 = vunpack.c.h.b16 %v1632
    %v1959 = vunpack.c.l.b16 %v1633
    %v1960 = vunpack.c.h.b16 %v1633
    %v1961 = vunpack.c.l.b16 %v1634
    %v1962 = vunpack.c.h.b16 %v1634
    %v1963 = vunpack.c.l.b16 %v1635
    %v1964 = vunpack.c.h.b16 %v1635
    %v1965 = vunpack.c.l.b16 %v1636
    %v1966 = vunpack.c.h.b16 %v1636
    %v1967 = vunpack.c.l.b16 %v1637
    %v1968 = vunpack.c.h.b16 %v1637
    %v1969 = vunpack.c.l.b16 %v1638
    %v1970 = vunpack.c.h.b16 %v1638
    %v1971 = vunpack.c.l.b16 %v1639
    %v1972 = vunpack.c.h.b16 %v1639
    %v1973 = vunpack.c.l.b16 %v1640
    %v1974 = vunpack.c.h.b16 %v1640
    %v1975 = vunpack.c.l.b16 %v1641
    %v1976 = vunpack.c.h.b16 %v1641
    %v1977 = vunpack.c.l.b16 %v1642
    %v1978 = vunpack.c.h.b16 %v1642
    %v1979 = vunpack.c.l.b16 %v1643
    %v1980 = vunpack.c.h.b16 %v1643
    %v1981 = vunpack.c.l.b16 %v1644
    %v1982 = vunpack.c.h.b16 %v1644
    %v1983 = vunpack.c.l.b16 %v1645
    %v1984 = vunpack.c.h.b16 %v1645
    %v1985 = vunpack.c.l.b16 %v1646
    %v1986 = vunpack.c.h.b16 %v1646
    %v1987 = vunpack.c.l.b16 %v1647
    %v1988 = vunpack.c.h.b16 %v1647
    %v1989 = vunpack.c.l.b16 %v1648
    %v1990 = vunpack.c.h.b16 %v1648
    %v1991 = vunpack.c.l.b16 %v1649
    %v1992 = vunpack.c.h.b16 %v1649
    %v1993 = vunpack.c.l.b16 %v1650
    %v1994 = vunpack.c.h.b16 %v1650
    %v1995 = vunpack.c.l.b16 %v1651
    %v1996 = vunpack.c.h.b16 %v1651
    %v1997 = vunpack.c.l.b16 %v1652
    %v1998 = vunpack.c.h.b16 %v1652
    %v1999 = vunpack.c.l.b16 %v1653
    %v2000 = vunpack.c.h.b16 %v1653
    %v2001 = vunpack.c.l.b16 %v1654
    %v2002 = vunpack.c.h.b16 %v1654
    %v2003 = vunpack.c.l.b16 %v1655
    %v2004 = vunpack.c.h.b16 %v1655
    %v2005 = vunpack.c.l.b16 %v1656
    %v2006 = vunpack.c.h.b16 %v1656
    %v2007 = vunpack.c.l.b16 %v1657
    %v2008 = vunpack.c.h.b16 %v1657
    %v2009 = vunpack.c.l.b16 %v1658
    %v2010 = vunpack.c.h.b16 %v1658
    %v2011 = vunpack.c.l.b16 %v1659
    %v2012 = vunpack.c.h.b16 %v1659
    %v2013 = vunpack.c.l.b16 %v1660
    %v2014 = vunpack.c.h.b16 %v1660
    %v2015 = vunpack.c.l.b16 %v1661
    %v2016 = vunpack.c.h.b16 %v1661
    %v2017 = vunpack.c.l.b16 %v1662
    %v2018 = vunpack.c.h.b16 %v1662
    %v2019 = vunpack.c.l.b16 %v1663
    %v2020 = vunpack.c.h.b16 %v1663
    %v2021 = vunpack.c.l.b16 %v1664
    %v2022 = vunpack.c.h.b16 %v1664
    %v2023 = vunpack.c.l.b16 %v1665
    %v2024 = vunpack.c.h.b16 %v1665
    %v2025 = vunpack.c.l.b16 %v1666
    %v2026 = vunpack.c.h.b16 %v1666
    %v2027 = vunpack.c.l.b16 %v1667
    %v2028 = vunpack.c.h.b16 %v1667
    %v2029 = vunpack.c.l.b16 %v1668
    %v2030 = vunpack.c.h.b16 %v1668
    %v2031 = vunpack.c.l.b16 %v1669
    %v2032 = vunpack.c.h.b16 %v1669
    %v2033 = vunpack.c.l.b16 %v1670
    %v2034 = vunpack.c.h.b16 %v1670
    %v2035 = vunpack.c.l.b16 %v1671
    %v2036 = vunpack.c.h.b16 %v1671
    %v2037 = vunpack.c.l.b16 %v1672
    %v2038 = vunpack.c.h.b16 %v1672
    %v2039 = vunpack.c.l.b16 %v1673
    %v2040 = vunpack.c.h.b16 %v1673
    %v2041 = vunpack.c.l.b16 %v1674
    %v2042 = vunpack.c.h.b16 %v1674
    %v2043 = vunpack.c.l.b16 %v1675
    %v2044 = vunpack.c.h.b16 %v1675
    %v2045 = vunpack.c.l.b16 %v1676
    %v2046 = vunpack.c.h.b16 %v1676
    %v2047 = vunpack.c.l.b16 %v1677
    %v2048 = vunpack.c.h.b16 %v1677
    %v2049 = vunpack.c.l.b16 %v1678
    %v2050 = vunpack.c.h.b16 %v1678
    %v2051 = vunpack.c.l.b16 %v1679
    %v2052 = vunpack.c.h.b16 %v1679
    %v2053 = vunpack.c.l.b16 %v1680
    %v2054 = vunpack.c.h.b16 %v1680
    %v2055 = vunpack.c.l.b16 %v1681
    %v2056 = vunpack.c.h.b16 %v1681
    %v2057 = vunpack.c.l.b16 %v1682
    %v2058 = vunpack.c.h.b16 %v1682
    %v2059 = vunpack.c.l.b16 %v1683
    %v2060 = vunpack.c.h.b16 %v1683
    %v2061 = vunpack.c.l.b16 %v1684
    %v2062 = vunpack.c.h.b16 %v1684
    %v2063 = vunpack.c.l.b16 %v1685
    %v2064 = vunpack.c.h.b16 %v1685
    %v2065 = vunpack.c.l.b16 %v1686
    %v2066 = vunpack.c.h.b16 %v1686
    %v2067 = vunpack.c.l.b16 %v1687
    %v2068 = vunpack.c.h.b16 %v1687
    %v2069 = vunpack.c.l.b16 %v1688
    %v2070 = vunpack.c.h.b16 %v1688
    %v2071 = vunpack.c.l.b16 %v1689
    %v2072 = vunpack.c.h.b16 %v1689
    %v2073 = vunpack.c.l.b16 %v1690
    %v2074 = vunpack.c.h.b16 %v1690
    %v2075 = vunpack.c.l.b16 %v1691
    %v2076 = vunpack.c.h.b16 %v1691
    %v2077 = vunpack.c.l.b16 %v1692
    %v2078 = vunpack.c.h.b16 %v1692
    %v2079 = vunpack.c.l.b16 %v1693
    %v2080 = vunpack.c.h.b16 %v1693
    %v2081 = vunpack.c.l.b16 %v1694
    %v2082 = vunpack.c.h.b16 %v1694
    %v2083 = vunpack.c.l.b16 %v1695
    %v2084 = vunpack.c.h.b16 %v1695
    %v2085 = vunpack.c.l.b16 %v1696
    %v2086 = vunpack.c.h.b16 %v1696
    %v2087 = vunpack.c.l.b16 %v1697
    %v2088 = vunpack.c.h.b16 %v1697
    %v2089 = vunpack.c.l.b16 %v1698
    %v2090 = vunpack.c.h.b16 %v1698
    %v2091 = vunpack.c.l.b16 %v1699
    %v2092 = vunpack.c.h.b16 %v1699
    %v2093 = vunpack.c.l.b16 %v1700
    %v2094 = vunpack.c.h.b16 %v1700
    %v2095 = vunpack.c.l.b16 %v1701
    %v2096 = vunpack.c.h.b16 %v1701
    %v2097 = vunpack.c.l.b16 %v1702
    %v2098 = vunpack.c.h.b16 %v1702
    %v2099 = vunpack.c.l.b16 %v1703
    %v2100 = vunpack.c.h.b16 %v1703
    %v2101 = vunpack.c.l.b16 %v1704
    %v2102 = vunpack.c.h.b16 %v1704
    %v2103 = vunpack.c.l.b16 %v1705
    %v2104 = vunpack.c.h.b16 %v1705
    %v2105 = vunpack.c.l.b16 %v1706
    %v2106 = vunpack.c.h.b16 %v1706
    %v2107 = vunpack.c.l.b16 %v1707
    %v2108 = vunpack.c.h.b16 %v1707
    %v2109 = vunpack.c.l.b16 %v1708
    %v2110 = vunpack.c.h.b16 %v1708
    %v2111 = vunpack.c.l.b16 %v1709
    %v2112 = vunpack.c.h.b16 %v1709
    %v2113 = vunpack.c.l.b16 %v1710
    %v2114 = vunpack.c.h.b16 %v1710
    %v2115 = vunpack.c.l.b16 %v1711
    %v2116 = vunpack.c.h.b16 %v1711
    %v2117 = vunpack.c.l.b16 %v1712
    %v2118 = vunpack.c.h.b16 %v1712
    %v2119 = vpack.c.b16 %v1867, %v1863
    %v2120 = vpack.c.b16 %v1868, %v1864
    %v2121 = vpack.c.b16 %v1869, %v1865
    %v2122 = vpack.c.b16 %v1870, %v1866
    %v2123 = vpack.c.b16 %v1875, %v1871
    %v2124 = vpack.c.b16 %v1876, %v1872
    %v2125 = vpack.c.b16 %v1877, %v1873
    %v2126 = vpack.c.b16 %v1878, %v1874
    %v2127 = vpack.c.b16 %v1883, %v1879
    %v2128 = vpack.c.b16 %v1884, %v1880
    %v2129 = vpack.c.b16 %v1885, %v1881
    %v2130 = vpack.c.b16 %v1886, %v1882
    %v2131 = vpack.c.b16 %v1891, %v1887
    %v2132 = vpack.c.b16 %v1892, %v1888
    %v2133 = vpack.c.b16 %v1893, %v1889
    %v2134 = vpack.c.b16 %v1894, %v1890
    %v2135 = vpack.c.b16 %v1899, %v1895
    %v2136 = vpack.c.b16 %v1900, %v1896
    %v2137 = vpack.c.b16 %v1901, %v1897
    %v2138 = vpack.c.b16 %v1902, %v1898
    %v2139 = vpack.c.b16 %v1907, %v1903
    %v2140 = vpack.c.b16 %v1908, %v1904
    %v2141 = vpack.c.b16 %v1909, %v1905
    %v2142 = vpack.c.b16 %v1910, %v1906
    %v2143 = vpack.c.b16 %v1915, %v1911
    %v2144 = vpack.c.b16 %v1916, %v1912
    %v2145 = vpack.c.b16 %v1917, %v1913
    %v2146 = vpack.c.b16 %v1918, %v1914
    %v2147 = vpack.c.b16 %v1923, %v1919
    %v2148 = vpack.c.b16 %v1924, %v1920
    %v2149 = vpack.c.b16 %v1925, %v1921
    %v2150 = vpack.c.b16 %v1926, %v1922
    %v2151 = vpack.c.b16 %v1931, %v1927
    %v2152 = vpack.c.b16 %v1932, %v1928
    %v2153 = vpack.c.b16 %v1933, %v1929
    %v2154 = vpack.c.b16 %v1934, %v1930
    %v2155 = vpack.c.b16 %v1939, %v1935
    %v2156 = vpack.c.b16 %v1940, %v1936
    %v2157 = vpack.c.b16 %v1941, %v1937
    %v2158 = vpack.c.b16 %v1942, %v1938
    %v2159 = vpack.c.b16 %v1947, %v1943
    %v2160 = vpack.c.b16 %v1948, %v1944
    %v2161 = vpack.c.b16 %v1949, %v1945
    %v2162 = vpack.c.b16 %v1950, %v1946
    %v2163 = vpack.c.b16 %v1955, %v1951
    %v2164 = vpack.c.b16 %v1956, %v1952
    %v2165 = vpack.c.b16 %v1957, %v1953
    %v2166 = vpack.c.b16 %v1958, %v1954
    %v2167 = vpack.c.b16 %v1963, %v1959
    %v2168 = vpack.c.b16 %v1964, %v1960
    %v2169 = vpack.c.b16 %v1965, %v1961
    %v2170 = vpack.c.b16 %v1966, %v1962
    %v2171 = vpack.c.b16 %v1971, %v1967
    %v2172 = vpack.c.b16 %v1972, %v1968
    %v2173 = vpack.c.b16 %v1973, %v1969
    %v2174 = vpack.c.b16 %v1974, %v1970
    %v2175 = vpack.c.b16 %v1979, %v1975
    %v2176 = vpack.c.b16 %v1980, %v1976
    %v2177 = vpack.c.b16 %v1981, %v1977
    %v2178 = vpack.c.b16 %v1982, %v1978
    %v2179 = vpack.c.b16 %v1987, %v1983
    %v2180 = vpack.c.b16 %v1988, %v1984
    %v2181 = vpack.c.b16 %v1989, %v1985
    %v2182 = vpack.c.b16 %v1990, %v1986
    %v2183 = vpack.c.b16 %v1995, %v1991
    %v2184 = vpack.c.b16 %v1996, %v1992
    %v2185 = vpack.c.b16 %v1997, %v1993
    %v2186 = vpack.c.b16 %v1998, %v1994
    %v2187 = vpack.c.b16 %v2003, %v1999
    %v2188 = vpack.c.b16 %v2004, %v2000
    %v2189 = vpack.c.b16 %v2005, %v2001
    %v2190 = vpack.c.b16 %v2006, %v2002
    %v2191 = vpack.c.b16 %v2011, %v2007
    %v2192 = vpack.c.b16 %v2012, %v2008
    %v2193 = vpack.c.b16 %v2013, %v2009
    %v2194 = vpack.c.b16 %v2014, %v2010
    %v2195 = vpack.c.b16 %v2019, %v2015
    %v2196 = vpack.c.b16 %v2020, %v2016
    %v2197 = vpack.c.b16 %v2021, %v2017
    %v2198 = vpack.c.b16 %v2022, %v2018
    %v2199 = vpack.c.b16 %v2027, %v2023
    %v2200 = vpack.c.b16 %v2028, %v2024
    %v2201 = vpack.c.b16 %v2029, %v2025
    %v2202 = vpack.c.b16 %v2030, %v2026
    %v2203 = vpack.c.b16 %v2035, %v2031
    %v2204 = vpack.c.b16 %v2036, %v2032
    %v2205 = vpack.c.b16 %v2037, %v2033
    %v2206 = vpack.c.b16 %v2038, %v2034
    %v2207 = vpack.c.b16 %v2043, %v2039
    %v2208 = vpack.c.b16 %v2044, %v2040
    %v2209 = vpack.c.b16 %v2045, %v2041
    %v2210 = vpack.c.b16 %v2046, %v2042
    %v2211 = vpack.c.b16 %v2051, %v2047
    %v2212 = vpack.c.b16 %v2052, %v2048
    %v2213 = vpack.c.b16 %v2053, %v2049
    %v2214 = vpack.c.b16 %v2054, %v2050
    %v2215 = vpack.c.b16 %v2059, %v2055
    %v2216 = vpack.c.b16 %v2060, %v2056
    %v2217 = vpack.c.b16 %v2061, %v2057
    %v2218 = vpack.c.b16 %v2062, %v2058
    %v2219 = vpack.c.b16 %v2067, %v2063
    %v2220 = vpack.c.b16 %v2068, %v2064
    %v2221 = vpack.c.b16 %v2069, %v2065
    %v2222 = vpack.c.b16 %v2070, %v2066
    %v2223 = vpack.c.b16 %v2075, %v2071
    %v2224 = vpack.c.b16 %v2076, %v2072
    %v2225 = vpack.c.b16 %v2077, %v2073
    %v2226 = vpack.c.b16 %v2078, %v2074
    %v2227 = vpack.c.b16 %v2083, %v2079
    %v2228 = vpack.c.b16 %v2084, %v2080
    %v2229 = vpack.c.b16 %v2085, %v2081
    %v2230 = vpack.c.b16 %v2086, %v2082
    %v2231 = vpack.c.b16 %v2091, %v2087
    %v2232 = vpack.c.b16 %v2092, %v2088
    %v2233 = vpack.c.b16 %v2093, %v2089
    %v2234 = vpack.c.b16 %v2094, %v2090
    %v2235 = vpack.c.b16 %v2099, %v2095
    %v2236 = vpack.c.b16 %v2100, %v2096
    %v2237 = vpack.c.b16 %v2101, %v2097
    %v2238 = vpack.c.b16 %v2102, %v2098
    %v2239 = vpack.c.b16 %v2107, %v2103
    %v2240 = vpack.c.b16 %v2108, %v2104
    %v2241 = vpack.c.b16 %v2109, %v2105
    %v2242 = vpack.c.b16 %v2110, %v2106
    %v2243 = vpack.c.b16 %v2115, %v2111
    %v2244 = vpack.c.b16 %v2116, %v2112
    %v2245 = vpack.c.b16 %v2117, %v2113
    %v2246 = vpack.c.b16 %v2118, %v2114
    %2375 = vmatprep.subr.bf16.mxu0 %v2120
    %2376 = vmatpush1.bf16.msra.mxu0 %v2119
    %2377 = vmatprep.subr.bf16.mxu0 %v2124
    %2378 = vmatpush1.bf16.msra.mxu0 %v2123
    %2379 = vmatprep.subr.bf16.mxu0 %v2128
    %2380 = vmatpush1.bf16.msra.mxu0 %v2127
    %2381 = vmatprep.subr.bf16.mxu0 %v2132
    %2382 = vmatpush1.bf16.msra.mxu0 %v2131
    %2383 = vmatprep.subr.bf16.mxu0 %v2136
    %2384 = vmatpush1.bf16.msra.mxu0 %v2135
    %2385 = vmatprep.subr.bf16.mxu0 %v2140
    %2386 = vmatpush1.bf16.msra.mxu0 %v2139
    %2387 = vmatprep.subr.bf16.mxu0 %v2144
    %2388 = vmatpush1.bf16.msra.mxu0 %v2143
    %2389 = vmatprep.subr.bf16.mxu0 %v2148
    %2390 = vmatpush1.bf16.msra.mxu0 %v2147
    %2391 = vmatprep.subr.bf16.mxu0 %v2152
    %2392 = vmatpush1.bf16.msra.mxu0 %v2151
    %2393 = vmatprep.subr.bf16.mxu0 %v2156
    %2394 = vmatpush1.bf16.msra.mxu0 %v2155
    %2395 = vmatprep.subr.bf16.mxu0 %v2160
    %2396 = vmatpush1.bf16.msra.mxu0 %v2159
    %2397 = vmatprep.subr.bf16.mxu0 %v2164
    %2398 = vmatpush1.bf16.msra.mxu0 %v2163
    %2399 = vmatprep.subr.bf16.mxu0 %v2168
    %2400 = vmatpush1.bf16.msra.mxu0 %v2167
    %2401 = vmatprep.subr.bf16.mxu0 %v2172
    %2402 = vmatpush1.bf16.msra.mxu0 %v2171
    %2403 = vmatprep.subr.bf16.mxu0 %v2176
    %2404 = vmatpush1.bf16.msra.mxu0 %v2175
    %2405 = vmatprep.subr.bf16.mxu0 %v2180
    %2406 = vmatpush1.bf16.msra.mxu0 %v2179
    %2407 = vmatprep.mubr.bf16.mxu0 %v1582
    %2408 = vmatmul.mubr.bf16.gmra.mrb[0].mxu0 %v1581
    %v2409 = vpop.f32.mrb[0].mxu0
    %v2410 = vadd.f32 %v1718, %v2409
    %v2411 = vpop.f32.mrb[0].mxu0
    %v2412 = vadd.f32 %v1722, %v2411
    %v2413 = vpop.f32.mrb[0].mxu0
    %v2414 = vadd.f32 %v1718, %v2413
    %v2415 = vpop.f32.mrb[0].mxu0
    %v2416 = vadd.f32 %v1722, %v2415
    %2417 = vdwg.mxu0
    %2418 = vmatprep.subr.bf16.mxu0 %v2184
    %2419 = vmatpush1.bf16.msra.mxu0 %v2183
    %2420 = vmatprep.subr.bf16.mxu0 %v2188
    %2421 = vmatpush1.bf16.msra.mxu0 %v2187
    %2422 = vmatprep.subr.bf16.mxu0 %v2192
    %2423 = vmatpush1.bf16.msra.mxu0 %v2191
    %2424 = vmatprep.subr.bf16.mxu0 %v2196
    %2425 = vmatpush1.bf16.msra.mxu0 %v2195
    %2426 = vmatprep.subr.bf16.mxu0 %v2200
    %2427 = vmatpush1.bf16.msra.mxu0 %v2199
    %2428 = vmatprep.subr.bf16.mxu0 %v2204
    %2429 = vmatpush1.bf16.msra.mxu0 %v2203
    %2430 = vmatprep.subr.bf16.mxu0 %v2208
    %2431 = vmatpush1.bf16.msra.mxu0 %v2207
    %2432 = vmatprep.subr.bf16.mxu0 %v2212
    %2433 = vmatpush1.bf16.msra.mxu0 %v2211
    %2434 = vmatprep.subr.bf16.mxu0 %v2216
    %2435 = vmatpush1.bf16.msra.mxu0 %v2215
    %2436 = vmatprep.subr.bf16.mxu0 %v2220
    %2437 = vmatpush1.bf16.msra.mxu0 %v2219
    %2438 = vmatprep.subr.bf16.mxu0 %v2224
    %2439 = vmatpush1.bf16.msra.mxu0 %v2223
    %2440 = vmatprep.subr.bf16.mxu0 %v2228
    %2441 = vmatpush1.bf16.msra.mxu0 %v2227
    %2442 = vmatprep.subr.bf16.mxu0 %v2232
    %2443 = vmatpush1.bf16.msra.mxu0 %v2231
    %2444 = vmatprep.subr.bf16.mxu0 %v2236
    %2445 = vmatpush1.bf16.msra.mxu0 %v2235
    %2446 = vmatprep.subr.bf16.mxu0 %v2240
    %2447 = vmatpush1.bf16.msra.mxu0 %v2239
    %2448 = vmatprep.subr.bf16.mxu0 %v2244
    %2449 = vmatpush1.bf16.msra.mxu0 %v2243
    %2450 = vmatprep.mubr.bf16.mxu0 %v1584
    %2451 = vmatmul.mubr.bf16.gmra.mrb[0].mxu0 %v1583
    %v2452 = vpop.f32.mrb[0].mxu0
    %v2453 = vadd.f32 %v2410, %v2452
    %v2454 = vpop.f32.mrb[0].mxu0
    %v2455 = vadd.f32 %v2412, %v2454
    %v2456 = vpop.f32.mrb[0].mxu0
    %v2457 = vadd.f32 %v2414, %v2456
    %v2458 = vpop.f32.mrb[0].mxu0
    %v2459 = vadd.f32 %v2416, %v2458
    %2460 = vdwg.mxu0
    %2461 = vmatprep.subr.bf16.mxu0 %v2122
    %2462 = vmatpush1.bf16.msra.mxu0 %v2121
    %2463 = vmatprep.subr.bf16.mxu0 %v2126
    %2464 = vmatpush1.bf16.msra.mxu0 %v2125
    %2465 = vmatprep.subr.bf16.mxu0 %v2130
    %2466 = vmatpush1.bf16.msra.mxu0 %v2129
    %2467 = vmatprep.subr.bf16.mxu0 %v2134
    %2468 = vmatpush1.bf16.msra.mxu0 %v2133
    %2469 = vmatprep.subr.bf16.mxu0 %v2138
    %2470 = vmatpush1.bf16.msra.mxu0 %v2137
    %2471 = vmatprep.subr.bf16.mxu0 %v2142
    %2472 = vmatpush1.bf16.msra.mxu0 %v2141
    %2473 = vmatprep.subr.bf16.mxu0 %v2146
    %2474 = vmatpush1.bf16.msra.mxu0 %v2145
    %2475 = vmatprep.subr.bf16.mxu0 %v2150
    %2476 = vmatpush1.bf16.msra.mxu0 %v2149
    %2477 = vmatprep.subr.bf16.mxu0 %v2154
    %2478 = vmatpush1.bf16.msra.mxu0 %v2153
    %2479 = vmatprep.subr.bf16.mxu0 %v2158
    %2480 = vmatpush1.bf16.msra.mxu0 %v2157
    %2481 = vmatprep.subr.bf16.mxu0 %v2162
    %2482 = vmatpush1.bf16.msra.mxu0 %v2161
    %2483 = vmatprep.subr.bf16.mxu0 %v2166
    %2484 = vmatpush1.bf16.msra.mxu0 %v2165
    %2485 = vmatprep.subr.bf16.mxu0 %v2170
    %2486 = vmatpush1.bf16.msra.mxu0 %v2169
    %2487 = vmatprep.subr.bf16.mxu0 %v2174
    %2488 = vmatpush1.bf16.msra.mxu0 %v2173
    %2489 = vmatprep.subr.bf16.mxu0 %v2178
    %2490 = vmatpush1.bf16.msra.mxu0 %v2177
    %2491 = vmatprep.subr.bf16.mxu0 %v2182
    %2492 = vmatpush1.bf16.msra.mxu0 %v2181
    %2493 = vmatprep.mubr.bf16.mxu0 %v1582
    %2494 = vmatmul.mubr.bf16.gmra.mrb[0].mxu0 %v1581
    %v2495 = vpop.f32.mrb[0].mxu0
    %v2496 = vadd.f32 %v1726, %v2495
    %v2497 = vpop.f32.mrb[0].mxu0
    %v2498 = vadd.f32 %v1730, %v2497
    %v2499 = vpop.f32.mrb[0].mxu0
    %v2500 = vadd.f32 %v1726, %v2499
    %v2501 = vpop.f32.mrb[0].mxu0
    %v2502 = vadd.f32 %v1730, %v2501
    %2503 = vdwg.mxu0
    %2504 = vmatprep.subr.bf16.mxu0 %v2186
    %2505 = vmatpush1.bf16.msra.mxu0 %v2185
    %2506 = vmatprep.subr.bf16.mxu0 %v2190
    %2507 = vmatpush1.bf16.msra.mxu0 %v2189
    %2508 = vmatprep.subr.bf16.mxu0 %v2194
    %2509 = vmatpush1.bf16.msra.mxu0 %v2193
    %2510 = vmatprep.subr.bf16.mxu0 %v2198
    %2511 = vmatpush1.bf16.msra.mxu0 %v2197
    %2512 = vmatprep.subr.bf16.mxu0 %v2202
    %2513 = vmatpush1.bf16.msra.mxu0 %v2201
    %2514 = vmatprep.subr.bf16.mxu0 %v2206
    %2515 = vmatpush1.bf16.msra.mxu0 %v2205
    %2516 = vmatprep.subr.bf16.mxu0 %v2210
    %2517 = vmatpush1.bf16.msra.mxu0 %v2209
    %2518 = vmatprep.subr.bf16.mxu0 %v2214
    %2519 = vmatpush1.bf16.msra.mxu0 %v2213
    %2520 = vmatprep.subr.bf16.mxu0 %v2218
    %2521 = vmatpush1.bf16.msra.mxu0 %v2217
    %2522 = vmatprep.subr.bf16.mxu0 %v2222
    %2523 = vmatpush1.bf16.msra.mxu0 %v2221
    %2524 = vmatprep.subr.bf16.mxu0 %v2226
    %2525 = vmatpush1.bf16.msra.mxu0 %v2225
    %2526 = vmatprep.subr.bf16.mxu0 %v2230
    %2527 = vmatpush1.bf16.msra.mxu0 %v2229
    %2528 = vmatprep.subr.bf16.mxu0 %v2234
    %2529 = vmatpush1.bf16.msra.mxu0 %v2233
    %2530 = vmatprep.subr.bf16.mxu0 %v2238
    %2531 = vmatpush1.bf16.msra.mxu0 %v2237
    %2532 = vmatprep.subr.bf16.mxu0 %v2242
    %2533 = vmatpush1.bf16.msra.mxu0 %v2241
    %2534 = vmatprep.subr.bf16.mxu0 %v2246
    %2535 = vmatpush1.bf16.msra.mxu0 %v2245
    %2536 = vmatprep.mubr.bf16.mxu0 %v1584
    %2537 = vmatmul.mubr.bf16.gmra.mrb[0].mxu0 %v1583
    %v2538 = vpop.f32.mrb[0].mxu0
    %v2539 = vadd.f32 %v2496, %v2538
    %v2540 = vpop.f32.mrb[0].mxu0
    %v2541 = vadd.f32 %v2498, %v2540
    %v2542 = vpop.f32.mrb[0].mxu0
    %v2543 = vadd.f32 %v2500, %v2542
    %v2544 = vpop.f32.mrb[0].mxu0
    %v2545 = vadd.f32 %v2502, %v2544
    %2546 = vdwg.mxu0
    %v2547 = vmax.f32 %v2453, 0.0
    %v2548 = vmax.f32 %v2455, 0.0
    %v2549 = vmax.f32 %v2539, 0.0
    %v2550 = vmax.f32 %v2541, 0.0
    %v2551 = vmax.f32 %v2457, 0.0
    %v2552 = vmax.f32 %v2459, 0.0
    %v2553 = vmax.f32 %v2543, 0.0
    %v2554 = vmax.f32 %v2545, 0.0
    %v2555 = vpack.c.bf16 %v2551, %v2547
    %v2556 = vpack.c.bf16 %v2552, %v2548
    %v2557 = vpack.c.bf16 %v2553, %v2549
    %v2558 = vpack.c.bf16 %v2554, %v2550
    %v2559 = vld [vmem:[#allocation10] sm:$0xff]
    %v2560 = vld [vmem:[#allocation10 + $0x8] sm:$0xff]
    %v2561 = vld [vmem:[#allocation10 + $0x10] sm:$0xff]
    %v2562 = vld [vmem:[#allocation10 + $0x18] sm:$0xff]
    %v2563 = vld [vmem:[#allocation10 + $0x20] sm:$0xff]
    %v2564 = vld [vmem:[#allocation10 + $0x28] sm:$0xff]
    %v2565 = vld [vmem:[#allocation10 + $0x30] sm:$0xff]
    %v2566 = vld [vmem:[#allocation10 + $0x38] sm:$0xff]
    %v2567 = vld [vmem:[#allocation10 + $0x40] sm:$0xff]
    %v2568 = vld [vmem:[#allocation10 + $0x48] sm:$0xff]
    %v2569 = vld [vmem:[#allocation10 + $0x50] sm:$0xff]
    %v2570 = vld [vmem:[#allocation10 + $0x58] sm:$0xff]
    %v2571 = vld [vmem:[#allocation10 + $0x60] sm:$0xff]
    %v2572 = vld [vmem:[#allocation10 + $0x68] sm:$0xff]
    %v2573 = vld [vmem:[#allocation10 + $0x70] sm:$0xff]
    %v2574 = vld [vmem:[#allocation10 + $0x78] sm:$0xff]
    %v2575 = vld [vmem:[#allocation10 + $0x80] sm:$0xff]
    %v2576 = vld [vmem:[#allocation10 + $0x88] sm:$0xff]
    %v2577 = vld [vmem:[#allocation10 + $0x90] sm:$0xff]
    %v2578 = vld [vmem:[#allocation10 + $0x98] sm:$0xff]
    %v2579 = vld [vmem:[#allocation10 + $0xa0] sm:$0xff]
    %v2580 = vld [vmem:[#allocation10 + $0xa8] sm:$0xff]
    %v2581 = vld [vmem:[#allocation10 + $0xb0] sm:$0xff]
    %v2582 = vld [vmem:[#allocation10 + $0xb8] sm:$0xff]
    %v2583 = vld [vmem:[#allocation10 + $0xc0] sm:$0xff]
    %v2584 = vld [vmem:[#allocation10 + $0xc8] sm:$0xff]
    %v2585 = vld [vmem:[#allocation10 + $0xd0] sm:$0xff]
    %v2586 = vld [vmem:[#allocation10 + $0xd8] sm:$0xff]
    %v2587 = vld [vmem:[#allocation10 + $0xe0] sm:$0xff]
    %v2588 = vld [vmem:[#allocation10 + $0xe8] sm:$0xff]
    %v2589 = vld [vmem:[#allocation10 + $0xf0] sm:$0xff]
    %v2590 = vld [vmem:[#allocation10 + $0xf8] sm:$0xff]
    %v2591 = vld [vmem:[#allocation10 + $0x100] sm:$0xff]
    %v2592 = vld [vmem:[#allocation10 + $0x108] sm:$0xff]
    %v2593 = vld [vmem:[#allocation10 + $0x110] sm:$0xff]
    %v2594 = vld [vmem:[#allocation10 + $0x118] sm:$0xff]
    %v2595 = vld [vmem:[#allocation10 + $0x120] sm:$0xff]
    %v2596 = vld [vmem:[#allocation10 + $0x128] sm:$0xff]
    %v2597 = vld [vmem:[#allocation10 + $0x130] sm:$0xff]
    %v2598 = vld [vmem:[#allocation10 + $0x138] sm:$0xff]
    %v2599 = vld [vmem:[#allocation10 + $0x140] sm:$0xff]
    %v2600 = vld [vmem:[#allocation10 + $0x148] sm:$0xff]
    %v2601 = vld [vmem:[#allocation10 + $0x150] sm:$0xff]
    %v2602 = vld [vmem:[#allocation10 + $0x158] sm:$0xff]
    %v2603 = vld [vmem:[#allocation10 + $0x160] sm:$0xff]
    %v2604 = vld [vmem:[#allocation10 + $0x168] sm:$0xff]
    %v2605 = vld [vmem:[#allocation10 + $0x170] sm:$0xff]
    %v2606 = vld [vmem:[#allocation10 + $0x178] sm:$0xff]
    %v2607 = vld [vmem:[#allocation10 + $0x180] sm:$0xff]
    %v2608 = vld [vmem:[#allocation10 + $0x188] sm:$0xff]
    %v2609 = vld [vmem:[#allocation10 + $0x190] sm:$0xff]
    %v2610 = vld [vmem:[#allocation10 + $0x198] sm:$0xff]
    %v2611 = vld [vmem:[#allocation10 + $0x1a0] sm:$0xff]
    %v2612 = vld [vmem:[#allocation10 + $0x1a8] sm:$0xff]
    %v2613 = vld [vmem:[#allocation10 + $0x1b0] sm:$0xff]
    %v2614 = vld [vmem:[#allocation10 + $0x1b8] sm:$0xff]
    %v2615 = vld [vmem:[#allocation10 + $0x1c0] sm:$0xff]
    %v2616 = vld [vmem:[#allocation10 + $0x1c8] sm:$0xff]
    %v2617 = vld [vmem:[#allocation10 + $0x1d0] sm:$0xff]
    %v2618 = vld [vmem:[#allocation10 + $0x1d8] sm:$0xff]
    %v2619 = vld [vmem:[#allocation10 + $0x1e0] sm:$0xff]
    %v2620 = vld [vmem:[#allocation10 + $0x1e8] sm:$0xff]
    %v2621 = vld [vmem:[#allocation10 + $0x1f0] sm:$0xff]
    %v2622 = vld [vmem:[#allocation10 + $0x1f8] sm:$0xff]
    %v2623 = vld [vmem:[%s8] sm:$0x3]
    %v2625 = vlaneseq
    %v2626 = vshrl.u32 %v2625, 7
    %v2627 = vsub.s32 0, %v2626
    %v2628 = vrot.slane %v2623, %v2627
    %v2629 = vlaneseq
    %v2630 = vshrl.u32 %v2629, 7
    %v2631 = vsub.s32 1, %v2630
    %v2632 = vrot.slane %v2623, %v2631
    %v2699 = vunpack.c.l.b16 %v2559
    %v2700 = vunpack.c.h.b16 %v2559
    %v2701 = vunpack.c.l.b16 %v2560
    %v2702 = vunpack.c.h.b16 %v2560
    %v2703 = vunpack.c.l.b16 %v2561
    %v2704 = vunpack.c.h.b16 %v2561
    %v2705 = vunpack.c.l.b16 %v2562
    %v2706 = vunpack.c.h.b16 %v2562
    %v2707 = vunpack.c.l.b16 %v2563
    %v2708 = vunpack.c.h.b16 %v2563
    %v2709 = vunpack.c.l.b16 %v2564
    %v2710 = vunpack.c.h.b16 %v2564
    %v2711 = vunpack.c.l.b16 %v2565
    %v2712 = vunpack.c.h.b16 %v2565
    %v2713 = vunpack.c.l.b16 %v2566
    %v2714 = vunpack.c.h.b16 %v2566
    %v2715 = vunpack.c.l.b16 %v2567
    %v2716 = vunpack.c.h.b16 %v2567
    %v2717 = vunpack.c.l.b16 %v2568
    %v2718 = vunpack.c.h.b16 %v2568
    %v2719 = vunpack.c.l.b16 %v2569
    %v2720 = vunpack.c.h.b16 %v2569
    %v2721 = vunpack.c.l.b16 %v2570
    %v2722 = vunpack.c.h.b16 %v2570
    %v2723 = vunpack.c.l.b16 %v2571
    %v2724 = vunpack.c.h.b16 %v2571
    %v2725 = vunpack.c.l.b16 %v2572
    %v2726 = vunpack.c.h.b16 %v2572
    %v2727 = vunpack.c.l.b16 %v2573
    %v2728 = vunpack.c.h.b16 %v2573
    %v2729 = vunpack.c.l.b16 %v2574
    %v2730 = vunpack.c.h.b16 %v2574
    %v2731 = vunpack.c.l.b16 %v2575
    %v2732 = vunpack.c.h.b16 %v2575
    %v2733 = vunpack.c.l.b16 %v2576
    %v2734 = vunpack.c.h.b16 %v2576
    %v2735 = vunpack.c.l.b16 %v2577
    %v2736 = vunpack.c.h.b16 %v2577
    %v2737 = vunpack.c.l.b16 %v2578
    %v2738 = vunpack.c.h.b16 %v2578
    %v2739 = vunpack.c.l.b16 %v2579
    %v2740 = vunpack.c.h.b16 %v2579
    %v2741 = vunpack.c.l.b16 %v2580
    %v2742 = vunpack.c.h.b16 %v2580
    %v2743 = vunpack.c.l.b16 %v2581
    %v2744 = vunpack.c.h.b16 %v2581
    %v2745 = vunpack.c.l.b16 %v2582
    %v2746 = vunpack.c.h.b16 %v2582
    %v2747 = vunpack.c.l.b16 %v2583
    %v2748 = vunpack.c.h.b16 %v2583
    %v2749 = vunpack.c.l.b16 %v2584
    %v2750 = vunpack.c.h.b16 %v2584
    %v2751 = vunpack.c.l.b16 %v2585
    %v2752 = vunpack.c.h.b16 %v2585
    %v2753 = vunpack.c.l.b16 %v2586
    %v2754 = vunpack.c.h.b16 %v2586
    %v2755 = vunpack.c.l.b16 %v2587
    %v2756 = vunpack.c.h.b16 %v2587
    %v2757 = vunpack.c.l.b16 %v2588
    %v2758 = vunpack.c.h.b16 %v2588
    %v2759 = vunpack.c.l.b16 %v2589
    %v2760 = vunpack.c.h.b16 %v2589
    %v2761 = vunpack.c.l.b16 %v2590
    %v2762 = vunpack.c.h.b16 %v2590
    %v2763 = vunpack.c.l.b16 %v2591
    %v2764 = vunpack.c.h.b16 %v2591
    %v2765 = vunpack.c.l.b16 %v2592
    %v2766 = vunpack.c.h.b16 %v2592
    %v2767 = vunpack.c.l.b16 %v2593
    %v2768 = vunpack.c.h.b16 %v2593
    %v2769 = vunpack.c.l.b16 %v2594
    %v2770 = vunpack.c.h.b16 %v2594
    %v2771 = vunpack.c.l.b16 %v2595
    %v2772 = vunpack.c.h.b16 %v2595
    %v2773 = vunpack.c.l.b16 %v2596
    %v2774 = vunpack.c.h.b16 %v2596
    %v2775 = vunpack.c.l.b16 %v2597
    %v2776 = vunpack.c.h.b16 %v2597
    %v2777 = vunpack.c.l.b16 %v2598
    %v2778 = vunpack.c.h.b16 %v2598
    %v2779 = vunpack.c.l.b16 %v2599
    %v2780 = vunpack.c.h.b16 %v2599
    %v2781 = vunpack.c.l.b16 %v2600
    %v2782 = vunpack.c.h.b16 %v2600
    %v2783 = vunpack.c.l.b16 %v2601
    %v2784 = vunpack.c.h.b16 %v2601
    %v2785 = vunpack.c.l.b16 %v2602
    %v2786 = vunpack.c.h.b16 %v2602
    %v2787 = vunpack.c.l.b16 %v2603
    %v2788 = vunpack.c.h.b16 %v2603
    %v2789 = vunpack.c.l.b16 %v2604
    %v2790 = vunpack.c.h.b16 %v2604
    %v2791 = vunpack.c.l.b16 %v2605
    %v2792 = vunpack.c.h.b16 %v2605
    %v2793 = vunpack.c.l.b16 %v2606
    %v2794 = vunpack.c.h.b16 %v2606
    %v2795 = vunpack.c.l.b16 %v2607
    %v2796 = vunpack.c.h.b16 %v2607
    %v2797 = vunpack.c.l.b16 %v2608
    %v2798 = vunpack.c.h.b16 %v2608
    %v2799 = vunpack.c.l.b16 %v2609
    %v2800 = vunpack.c.h.b16 %v2609
    %v2801 = vunpack.c.l.b16 %v2610
    %v2802 = vunpack.c.h.b16 %v2610
    %v2803 = vunpack.c.l.b16 %v2611
    %v2804 = vunpack.c.h.b16 %v2611
    %v2805 = vunpack.c.l.b16 %v2612
    %v2806 = vunpack.c.h.b16 %v2612
    %v2807 = vunpack.c.l.b16 %v2613
    %v2808 = vunpack.c.h.b16 %v2613
    %v2809 = vunpack.c.l.b16 %v2614
    %v2810 = vunpack.c.h.b16 %v2614
    %v2811 = vunpack.c.l.b16 %v2615
    %v2812 = vunpack.c.h.b16 %v2615
    %v2813 = vunpack.c.l.b16 %v2616
    %v2814 = vunpack.c.h.b16 %v2616
    %v2815 = vunpack.c.l.b16 %v2617
    %v2816 = vunpack.c.h.b16 %v2617
    %v2817 = vunpack.c.l.b16 %v2618
    %v2818 = vunpack.c.h.b16 %v2618
    %v2819 = vunpack.c.l.b16 %v2619
    %v2820 = vunpack.c.h.b16 %v2619
    %v2821 = vunpack.c.l.b16 %v2620
    %v2822 = vunpack.c.h.b16 %v2620
    %v2823 = vunpack.c.l.b16 %v2621
    %v2824 = vunpack.c.h.b16 %v2621
    %v2825 = vunpack.c.l.b16 %v2622
    %v2826 = vunpack.c.h.b16 %v2622
    %v2827 = vpack.c.b16 %v2701, %v2699
    %v2828 = vpack.c.b16 %v2702, %v2700
    %v2829 = vpack.c.b16 %v2705, %v2703
    %v2830 = vpack.c.b16 %v2706, %v2704
    %v2831 = vpack.c.b16 %v2709, %v2707
    %v2832 = vpack.c.b16 %v2710, %v2708
    %v2833 = vpack.c.b16 %v2713, %v2711
    %v2834 = vpack.c.b16 %v2714, %v2712
    %v2835 = vpack.c.b16 %v2717, %v2715
    %v2836 = vpack.c.b16 %v2718, %v2716
    %v2837 = vpack.c.b16 %v2721, %v2719
    %v2838 = vpack.c.b16 %v2722, %v2720
    %v2839 = vpack.c.b16 %v2725, %v2723
    %v2840 = vpack.c.b16 %v2726, %v2724
    %v2841 = vpack.c.b16 %v2729, %v2727
    %v2842 = vpack.c.b16 %v2730, %v2728
    %v2843 = vpack.c.b16 %v2733, %v2731
    %v2844 = vpack.c.b16 %v2734, %v2732
    %v2845 = vpack.c.b16 %v2737, %v2735
    %v2846 = vpack.c.b16 %v2738, %v2736
    %v2847 = vpack.c.b16 %v2741, %v2739
    %v2848 = vpack.c.b16 %v2742, %v2740
    %v2849 = vpack.c.b16 %v2745, %v2743
    %v2850 = vpack.c.b16 %v2746, %v2744
    %v2851 = vpack.c.b16 %v2749, %v2747
    %v2852 = vpack.c.b16 %v2750, %v2748
    %v2853 = vpack.c.b16 %v2753, %v2751
    %v2854 = vpack.c.b16 %v2754, %v2752
    %v2855 = vpack.c.b16 %v2757, %v2755
    %v2856 = vpack.c.b16 %v2758, %v2756
    %v2857 = vpack.c.b16 %v2761, %v2759
    %v2858 = vpack.c.b16 %v2762, %v2760
    %v2859 = vpack.c.b16 %v2765, %v2763
    %v2860 = vpack.c.b16 %v2766, %v2764
    %v2861 = vpack.c.b16 %v2769, %v2767
    %v2862 = vpack.c.b16 %v2770, %v2768
    %v2863 = vpack.c.b16 %v2773, %v2771
    %v2864 = vpack.c.b16 %v2774, %v2772
    %v2865 = vpack.c.b16 %v2777, %v2775
    %v2866 = vpack.c.b16 %v2778, %v2776
    %v2867 = vpack.c.b16 %v2781, %v2779
    %v2868 = vpack.c.b16 %v2782, %v2780
    %v2869 = vpack.c.b16 %v2785, %v2783
    %v2870 = vpack.c.b16 %v2786, %v2784
    %v2871 = vpack.c.b16 %v2789, %v2787
    %v2872 = vpack.c.b16 %v2790, %v2788
    %v2873 = vpack.c.b16 %v2793, %v2791
    %v2874 = vpack.c.b16 %v2794, %v2792
    %v2875 = vpack.c.b16 %v2797, %v2795
    %v2876 = vpack.c.b16 %v2798, %v2796
    %v2877 = vpack.c.b16 %v2801, %v2799
    %v2878 = vpack.c.b16 %v2802, %v2800
    %v2879 = vpack.c.b16 %v2805, %v2803
    %v2880 = vpack.c.b16 %v2806, %v2804
    %v2881 = vpack.c.b16 %v2809, %v2807
    %v2882 = vpack.c.b16 %v2810, %v2808
    %v2883 = vpack.c.b16 %v2813, %v2811
    %v2884 = vpack.c.b16 %v2814, %v2812
    %v2885 = vpack.c.b16 %v2817, %v2815
    %v2886 = vpack.c.b16 %v2818, %v2816
    %v2887 = vpack.c.b16 %v2821, %v2819
    %v2888 = vpack.c.b16 %v2822, %v2820
    %v2889 = vpack.c.b16 %v2825, %v2823
    %v2890 = vpack.c.b16 %v2826, %v2824
    %2955 = vmatprep.subr.bf16.mxu0 %v2828
    %2956 = vmatpush1.bf16.msra.mxu0 %v2827
    %2957 = vmatprep.subr.bf16.mxu0 %v2830
    %2958 = vmatpush1.bf16.msra.mxu0 %v2829
    %2959 = vmatprep.subr.bf16.mxu0 %v2832
    %2960 = vmatpush1.bf16.msra.mxu0 %v2831
    %2961 = vmatprep.subr.bf16.mxu0 %v2834
    %2962 = vmatpush1.bf16.msra.mxu0 %v2833
    %2963 = vmatprep.subr.bf16.mxu0 %v2836
    %2964 = vmatpush1.bf16.msra.mxu0 %v2835
    %2965 = vmatprep.subr.bf16.mxu0 %v2838
    %2966 = vmatpush1.bf16.msra.mxu0 %v2837
    %2967 = vmatprep.subr.bf16.mxu0 %v2840
    %2968 = vmatpush1.bf16.msra.mxu0 %v2839
    %2969 = vmatprep.subr.bf16.mxu0 %v2842
    %2970 = vmatpush1.bf16.msra.mxu0 %v2841
    %2971 = vmatprep.subr.bf16.mxu0 %v2844
    %2972 = vmatpush1.bf16.msra.mxu0 %v2843
    %2973 = vmatprep.subr.bf16.mxu0 %v2846
    %2974 = vmatpush1.bf16.msra.mxu0 %v2845
    %2975 = vmatprep.subr.bf16.mxu0 %v2848
    %2976 = vmatpush1.bf16.msra.mxu0 %v2847
    %2977 = vmatprep.subr.bf16.mxu0 %v2850
    %2978 = vmatpush1.bf16.msra.mxu0 %v2849
    %2979 = vmatprep.subr.bf16.mxu0 %v2852
    %2980 = vmatpush1.bf16.msra.mxu0 %v2851
    %2981 = vmatprep.subr.bf16.mxu0 %v2854
    %2982 = vmatpush1.bf16.msra.mxu0 %v2853
    %2983 = vmatprep.subr.bf16.mxu0 %v2856
    %2984 = vmatpush1.bf16.msra.mxu0 %v2855
    %2985 = vmatprep.subr.bf16.mxu0 %v2858
    %2986 = vmatpush1.bf16.msra.mxu0 %v2857
    %2987 = vmatprep.mubr.bf16.mxu0 %v2556
    %2988 = vmatmul.mubr.bf16.gmra.mrb[0].mxu0 %v2555
    %v2989 = vpop.f32.mrb[0].mxu0
    %v2990 = vadd.f32 %v2628, %v2989
    %v2991 = vpop.f32.mrb[0].mxu0
    %v2992 = vadd.f32 %v2632, %v2991
    %v2993 = vpop.f32.mrb[0].mxu0
    %v2994 = vadd.f32 %v2628, %v2993
    %v2995 = vpop.f32.mrb[0].mxu0
    %v2996 = vadd.f32 %v2632, %v2995
    %2997 = vdwg.mxu0
    %2998 = vmatprep.subr.bf16.mxu0 %v2860
    %2999 = vmatpush1.bf16.msra.mxu0 %v2859
    %3000 = vmatprep.subr.bf16.mxu0 %v2862
    %3001 = vmatpush1.bf16.msra.mxu0 %v2861
    %3002 = vmatprep.subr.bf16.mxu0 %v2864
    %3003 = vmatpush1.bf16.msra.mxu0 %v2863
    %3004 = vmatprep.subr.bf16.mxu0 %v2866
    %3005 = vmatpush1.bf16.msra.mxu0 %v2865
    %3006 = vmatprep.subr.bf16.mxu0 %v2868
    %3007 = vmatpush1.bf16.msra.mxu0 %v2867
    %3008 = vmatprep.subr.bf16.mxu0 %v2870
    %3009 = vmatpush1.bf16.msra.mxu0 %v2869
    %3010 = vmatprep.subr.bf16.mxu0 %v2872
    %3011 = vmatpush1.bf16.msra.mxu0 %v2871
    %3012 = vmatprep.subr.bf16.mxu0 %v2874
    %3013 = vmatpush1.bf16.msra.mxu0 %v2873
    %3014 = vmatprep.subr.bf16.mxu0 %v2876
    %3015 = vmatpush1.bf16.msra.mxu0 %v2875
    %3016 = vmatprep.subr.bf16.mxu0 %v2878
    %3017 = vmatpush1.bf16.msra.mxu0 %v2877
    %3018 = vmatprep.subr.bf16.mxu0 %v2880
    %3019 = vmatpush1.bf16.msra.mxu0 %v2879
    %3020 = vmatprep.subr.bf16.mxu0 %v2882
    %3021 = vmatpush1.bf16.msra.mxu0 %v2881
    %3022 = vmatprep.subr.bf16.mxu0 %v2884
    %3023 = vmatpush1.bf16.msra.mxu0 %v2883
    %3024 = vmatprep.subr.bf16.mxu0 %v2886
    %3025 = vmatpush1.bf16.msra.mxu0 %v2885
    %3026 = vmatprep.subr.bf16.mxu0 %v2888
    %3027 = vmatpush1.bf16.msra.mxu0 %v2887
    %3028 = vmatprep.subr.bf16.mxu0 %v2890
    %3029 = vmatpush1.bf16.msra.mxu0 %v2889
    %3030 = vmatprep.mubr.bf16.mxu0 %v2558
    %3031 = vmatmul.mubr.bf16.gmra.mrb[0].mxu0 %v2557
    %v3032 = vpop.f32.mrb[0].mxu0
    %v3033 = vadd.f32 %v2990, %v3032
    %v3034 = vpop.f32.mrb[0].mxu0
    %v3035 = vadd.f32 %v2992, %v3034
    %v3036 = vpop.f32.mrb[0].mxu0
    %v3037 = vadd.f32 %v2994, %v3036
    %v3038 = vpop.f32.mrb[0].mxu0
    %v3039 = vadd.f32 %v2996, %v3038
    %3040 = vdwg.mxu0
    %v3041 = vsub.f32 0.0, %v3033
    %v3042 = vsub.f32 0.0, %v3035
    %v3043 = vsub.f32 0.0, %v3037
    %v3044 = vsub.f32 0.0, %v3039
    %v3045 = vmul.f32 %v3041, 1.442695
    %v3046 = vpow.pop %v3045
    %v3047 = vmul.f32 %v3042, 1.442695
    %v3048 = vpow.pop %v3047
    %v3049 = vmul.f32 %v3043, 1.442695
    %v3050 = vpow.pop %v3049
    %v3051 = vmul.f32 %v3044, 1.442695
    %v3052 = vpow.pop %v3051
    %v3053 = vadd.f32 %v3046, 1.0
    %v3054 = vadd.f32 %v3048, 1.0
    %v3055 = vadd.f32 %v3050, 1.0
    %v3056 = vadd.f32 %v3052, 1.0
    %v3057 = vrcp.pop %v3053
    %v3058 = vrcp.pop %v3054
    %v3059 = vrcp.pop %v3055
    %v3060 = vrcp.pop %v3056
    %3061 = vst [vmem:[#allocation11] sm:$0xff] %v3057
    %3062 = vst [vmem:[#allocation11 + $0x8] sm:$0xff] %v3058
    %3063 = vst [vmem:[#allocation11 + $0x10] sm:$0xff] %v3059
    %3064 = vst [vmem:[#allocation11 + $0x18] sm:$0xff] %v3060
    // Predicated region
    $region58: #{tpu_custom_call.1} parent=1 // pred_check
      _
    $region59: #{tpu_custom_call.1} parent=1 // pred_check_branch
      %3066 = sbr.rel (0) target = $region61
    $region60: #{tpu_custom_call.1} parent=1 // pred_region
      %s3068 = ssub.s32 512, 512
      %3069 = vsyncadd [#allocation4], %s3068
      %s3070 = sshll.u32 [#allocation11], 4
      %s3071 = int_to_ptr.vmem [resolvable:$true] %s3070
      %3076 = dma.vmem_to_hbm [thread:$0]  %s3071, 512, %s9, [#allocation4], 256, 256, 16
    $region61: #{tpu_custom_call.1} parent=1 // pred_fallthru
      _
    // Predicated region
    $region62: #{tpu_custom_call.1} parent=1 // pred_check
      _
    $region63: #{tpu_custom_call.1} parent=1 // pred_check_branch
      %3078 = sbr.rel (0) target = $region65
    $region64: #{tpu_custom_call.1} parent=1 // pred_region
      %3079 = dma.done [#allocation4], 512
    $region65: #{tpu_custom_call.1} parent=1 // pred_fallthru
      _
    %3080 = vsyncpa [#allocation3], 1
    %3081 = vsyncpa [#allocation6], 1
    %3082 = vsyncpa [#allocation9], 1
    %3083 = vsyncpa [#allocation4], 1

</llo_original>
